<compile_context>
chip_gen: v7x
topology: tpu7x:2x2x1
jax: 0.10.0
libtpu: 0.0.40
codegen_flags: <defaults>
</compile_context>

<pallas_src>
import functools

import jax
import jax.numpy as jnp
from jax.experimental import pallas as pl
from jax.experimental.pallas import tpu as pltpu


# ----------------------------- fused kernel ----------------------------------


def _layernorm(x, gamma, beta, eps):
    mu = jnp.mean(x, axis=-1, keepdims=True)
    xc = x - mu
    var = jnp.mean(xc * xc, axis=-1, keepdims=True)
    return xc * jax.lax.rsqrt(var + eps) * gamma + beta


def _fused_attn_kernel(x_ref, wqkv_ref, gk_ref, bk_ref, gv_ref, bv_ref,
                       wout_ref, bout_ref, o_ref,
                       *, heads, dim_head, seq_len, eps):
    n = seq_len
    inner = heads * dim_head

    # --- to_qkv projection (no bias), f32 accumulation on the MXU ----------
    x = x_ref[0].astype(jnp.float32)                          # (n, dim)
    qkv = jnp.dot(x, wqkv_ref[...].astype(jnp.float32),
                  preferred_element_type=jnp.float32)         # (n, 3*inner)

    # Lane-tile aligned column windows (offsets are multiples of 128 when
    # inner is; at worst these are in-VMEM slices, never HBM traffic).
    q_all = qkv[:, 0:inner]
    k_all = qkv[:, inner:2 * inner]
    v_all = qkv[:, 2 * inner:3 * inner]

    # Causal mask: built once, shared by every head of this batch element.
    row = jax.lax.broadcasted_iota(jnp.int32, (n, n), 0)
    col = jax.lax.broadcasted_iota(jnp.int32, (n, n), 1)
    causal = row >= col
    inv_seq = jnp.float32(1.0 / seq_len)

    outs = []
    for h in range(heads):                 # static unroll over heads
        lo = h * dim_head
        hi = lo + dim_head
        q = q_all[:, lo:hi]                # (n, d)
        k = k_all[:, lo:hi]
        v = v_all[:, lo:hi]

        gk = gk_ref[h:h + 1, :]
        bk = bk_ref[h:h + 1, :]
        gv = gv_ref[h:h + 1, :]
        bv = bv_ref[h:h + 1, :]

        k_n = _layernorm(k, gk, bk, eps)
        v_n = _layernorm(v, gv, bv, eps)

        # A[t, s] = q_t . k_s   (contract last dims directly; no k transpose)
        a = jax.lax.dot_general(
            q, k_n,
            dimension_numbers=(((1,), (1,)), ((), ())),
            preferred_element_type=jnp.float32)
        a = jnp.where(causal, a, 0.0)

        # numerator: q_t^T (cumulative sum_{s<=t} k_s v_s^T) / seq_len
        num = jnp.dot(a, v_n, preferred_element_type=jnp.float32) * inv_seq
        # denominator: (cumsum_k[t] + eps) . q_t
        den = (jnp.sum(a, axis=-1, keepdims=True)
               + eps * jnp.sum(q, axis=-1, keepdims=True))

        outs.append(num * pl.reciprocal(den, approx=True))

    # Lane-dense (n, inner) slab, head-major == rearrange('b h u n e -> b u (h e n)')
    # with n == 1.
    heads_out = jnp.concatenate(outs, axis=-1)                # (n, inner)

    # --- to_out projection + bias (Dropout == identity at eval) ------------
    out = jnp.dot(heads_out, wout_ref[...].astype(jnp.float32),
                  preferred_element_type=jnp.float32) + bout_ref[...]
    o_ref[0] = out.astype(o_ref.dtype)


# ----------------------------- forward wrapper --------------------------------


def masked_g_attention(x, params, *, heads, dim_head, eps=1e-7):
    """Forward pass of Masked_G_Attention ('layernorm' type, eval mode)."""
    b, n, dim = x.shape
    inner = heads * dim_head

    kern = functools.partial(
        _fused_attn_kernel, heads=heads, dim_head=dim_head, seq_len=n, eps=eps)

    # Per-batch block for activations; constant block index for every weight
    # (Pallas keeps them resident in VMEM across grid steps).
    x_spec = pl.BlockSpec((1, n, dim), lambda bi: (bi, 0, 0))
    wqkv_spec = pl.BlockSpec((dim, 3 * inner), lambda bi: (0, 0))
    par_spec = pl.BlockSpec((heads, dim_head), lambda bi: (0, 0))
    wout_spec = pl.BlockSpec((inner, dim), lambda bi: (0, 0))
    bout_spec = pl.BlockSpec((1, dim), lambda bi: (0, 0))
    o_spec = pl.BlockSpec((1, n, dim), lambda bi: (bi, 0, 0))

    out = pl.pallas_call(
        kern,
        out_shape=jax.ShapeDtypeStruct((b, n, dim), jnp.float32),
        grid=(b,),
        in_specs=[x_spec, wqkv_spec,
                  par_spec, par_spec, par_spec, par_spec,
                  wout_spec, bout_spec],
        out_specs=o_spec,
        compiler_params=pltpu.CompilerParams(
            dimension_semantics=("parallel",)),
    )(x,
      params["w_qkv"],
      params["gamma_k"], params["beta_k"],
      params["gamma_v"], params["beta_v"],
      params["w_out"], params["b_out"].reshape(1, dim))

    return out


# ----------------------------- pure-JAX reference ----------------------------


def reference(x, params, *, heads, dim_head, eps=1e-7):
    b, n, dim = x.shape
    inner = heads * dim_head
    qkv = x @ params["w_qkv"]
    q, k, v = jnp.split(qkv, 3, axis=-1)

    def split_heads(t):
        return t.reshape(b, n, heads, dim_head).transpose(0, 2, 1, 3)

    q, k, v = map(split_heads, (q, k, v))

    def ln(t, g, bb):
        mu = t.mean(-1, keepdims=True)
        var = ((t - mu) ** 2).mean(-1, keepdims=True)
        return (t - mu) / jnp.sqrt(var + eps) * g + bb

    k = ln(k, params["gamma_k"][None, :, None, :], params["beta_k"][None, :, None, :])
    v = ln(v, params["gamma_v"][None, :, None, :], params["beta_v"][None, :, None, :])

    k_cum = jnp.cumsum(k, axis=2)
    scores = jnp.einsum("bhnd,bhne->bhnde", k, v)
    scores = jnp.cumsum(scores, axis=2) / n
    d_inv = 1.0 / jnp.einsum("bhnd,bhnd->bhn", k_cum + eps, q)
    out = jnp.einsum("bhnd,bhnde,bhn->bhne", q, scores, d_inv)
    out = out.transpose(0, 2, 1, 3).reshape(b, n, inner)
    return out @ params["w_out"] + params["b_out"]


# ----------------------------- main -------------------------------------------


if __name__ == "__main__":
    B, N, DIM = 2, 8, 32
    HEADS, DIM_HEAD = 4, 32          # inner = 128 -> lane-dense head slab
    INNER = HEADS * DIM_HEAD

    key = jax.random.PRNGKey(0)
    kx, k1, k2, k3, k4, k5, k6 = jax.random.split(key, 7)

    x = jax.random.normal(kx, (B, N, DIM), dtype=jnp.float32)

    params = {
        # to_qkv.weight^T : (dim, 3*inner), no bias
        "w_qkv": 0.05 * jax.random.normal(k1, (DIM, 3 * INNER), jnp.float32),
        # per-head LayerNorm affine params (module passes eps=1e-7 explicitly)
        "gamma_k": 1.0 + 0.05 * jax.random.normal(k2, (HEADS, DIM_HEAD), jnp.float32),
        "beta_k": 0.05 * jax.random.normal(k3, (HEADS, DIM_HEAD), jnp.float32),
        "gamma_v": 1.0 + 0.05 * jax.random.normal(k4, (HEADS, DIM_HEAD), jnp.float32),
        "beta_v": 0.05 * jax.random.normal(k5, (HEADS, DIM_HEAD), jnp.float32),
        # to_out: Linear(inner, dim) weight^T and bias
        "w_out": 0.05 * jax.random.normal(k6, (INNER, DIM), jnp.float32),
        "b_out": 0.01 * jnp.arange(DIM, dtype=jnp.float32),
    }

    out = masked_g_attention(x, params, heads=HEADS, dim_head=DIM_HEAD)
    out = jax.block_until_ready(out)

    ref = reference(x, params, heads=HEADS, dim_head=DIM_HEAD)
    assert out.shape == (B, N, DIM)
    max_err = float(jnp.max(jnp.abs(out - ref)))
    assert jnp.allclose(out, ref, rtol=5e-3, atol=5e-3), max_err

    print("KERNEL_OK")
</pallas_src>

<mosaic_0001>
module attributes {stable_mosaic.version = 11 : i64} {
  func.func @_fused_attn_kernel(%arg0: i32, %arg1: memref<1x8x32xf32, #tpu.memory_space<vmem>>, %arg2: memref<32x384xf32, #tpu.memory_space<vmem>>, %arg3: memref<4x32xf32, #tpu.memory_space<vmem>>, %arg4: memref<4x32xf32, #tpu.memory_space<vmem>>, %arg5: memref<4x32xf32, #tpu.memory_space<vmem>>, %arg6: memref<4x32xf32, #tpu.memory_space<vmem>>, %arg7: memref<128x32xf32, #tpu.memory_space<vmem>>, %arg8: memref<1x32xf32, #tpu.memory_space<vmem>>, %arg9: memref<1x8x32xf32, #tpu.memory_space<vmem>>) attributes {dimension_semantics = [#tpu.dimension_semantics<parallel>], iteration_bounds = array<i64: 2>, scalar_prefetch = 0 : i64, scratch_operands = 0 : i64, tpu.core_type = #tpu.core_type<tc>, window_params = [{transform_indices = @transform_0, window_bounds = array<i64: 1, 8, 32>}, {pipeline_mode = #tpu.pipeline_mode<synchronous>, transform_indices = @transform_1, window_bounds = array<i64: 32, 384>}, {pipeline_mode = #tpu.pipeline_mode<synchronous>, transform_indices = @transform_2, window_bounds = array<i64: 4, 32>}, {pipeline_mode = #tpu.pipeline_mode<synchronous>, transform_indices = @transform_3, window_bounds = array<i64: 4, 32>}, {pipeline_mode = #tpu.pipeline_mode<synchronous>, transform_indices = @transform_4, window_bounds = array<i64: 4, 32>}, {pipeline_mode = #tpu.pipeline_mode<synchronous>, transform_indices = @transform_5, window_bounds = array<i64: 4, 32>}, {pipeline_mode = #tpu.pipeline_mode<synchronous>, transform_indices = @transform_6, window_bounds = array<i64: 128, 32>}, {pipeline_mode = #tpu.pipeline_mode<synchronous>, transform_indices = @transform_7, window_bounds = array<i64: 1, 32>}, {transform_indices = @transform_8, window_bounds = array<i64: 1, 8, 32>}]} {
    %c0 = arith.constant 0 : index
    %c0_0 = arith.constant 0 : index
    %c0_1 = arith.constant 0 : index
    %0 = vector.load %arg1[%c0, %c0_0, %c0_1] : memref<1x8x32xf32, #tpu.memory_space<vmem>>, vector<1x8x32xf32>
    %1 = vector.shape_cast %0 : vector<1x8x32xf32> to vector<8x32xf32>
    %c0_2 = arith.constant 0 : index
    %c0_3 = arith.constant 0 : index
    %2 = vector.load %arg2[%c0_2, %c0_3] : memref<32x384xf32, #tpu.memory_space<vmem>>, vector<32x384xf32>
    %cst = arith.constant dense<0.000000e+00> : vector<8x384xf32>
    %3 = tpu.matmul %1, %2, %cst {dimension_numbers = #tpu.dot_dimension_numbers<[1], [0], [0], [1], [0, 0, 1, 1], [], []>} : vector<8x32xf32>, vector<32x384xf32>, vector<8x384xf32> -> vector<8x384xf32>
    %4 = vector.extract_strided_slice %3 {offsets = [0, 0], sizes = [8, 128], strides = [1, 1]} : vector<8x384xf32> to vector<8x128xf32>
    %5 = vector.extract_strided_slice %3 {offsets = [0, 128], sizes = [8, 128], strides = [1, 1]} : vector<8x384xf32> to vector<8x128xf32>
    %6 = vector.extract_strided_slice %3 {offsets = [0, 256], sizes = [8, 128], strides = [1, 1]} : vector<8x384xf32> to vector<8x128xf32>
    %7 = tpu.iota {dimensions = array<i32: 0>} : vector<8x8xi32>
    %8 = tpu.iota {dimensions = array<i32: 1>} : vector<8x8xi32>
    %9 = arith.cmpi sge, %7, %8 : vector<8x8xi32>
    %10 = vector.extract_strided_slice %4 {offsets = [0, 0], sizes = [8, 32], strides = [1, 1]} : vector<8x128xf32> to vector<8x32xf32>
    %11 = vector.extract_strided_slice %5 {offsets = [0, 0], sizes = [8, 32], strides = [1, 1]} : vector<8x128xf32> to vector<8x32xf32>
    %12 = vector.extract_strided_slice %6 {offsets = [0, 0], sizes = [8, 32], strides = [1, 1]} : vector<8x128xf32> to vector<8x32xf32>
    %c0_4 = arith.constant 0 : index
    %c0_5 = arith.constant 0 : index
    %13 = vector.load %arg3[%c0_4, %c0_5] : memref<4x32xf32, #tpu.memory_space<vmem>>, vector<1x32xf32>
    %c0_6 = arith.constant 0 : index
    %c0_7 = arith.constant 0 : index
    %14 = vector.load %arg4[%c0_6, %c0_7] : memref<4x32xf32, #tpu.memory_space<vmem>>, vector<1x32xf32>
    %c0_8 = arith.constant 0 : index
    %c0_9 = arith.constant 0 : index
    %15 = vector.load %arg5[%c0_8, %c0_9] : memref<4x32xf32, #tpu.memory_space<vmem>>, vector<1x32xf32>
    %c0_10 = arith.constant 0 : index
    %c0_11 = arith.constant 0 : index
    %16 = vector.load %arg6[%c0_10, %c0_11] : memref<4x32xf32, #tpu.memory_space<vmem>>, vector<1x32xf32>
    %cst_12 = arith.constant dense<0.000000e+00> : vector<8xf32>
    %17 = vector.multi_reduction <add>, %11, %cst_12 [1] : vector<8x32xf32> to vector<8xf32>
    %18 = vector.shape_cast %17 : vector<8xf32> to vector<8x1xf32>
    %cst_13 = arith.constant 3.200000e+01 : f32
    %19 = vector.broadcast %cst_13 : f32 to vector<8x1xf32>
    %20 = arith.divf %18, %19 : vector<8x1xf32>
    %21 = vector.broadcast %20 : vector<8x1xf32> to vector<8x32xf32>
    %22 = arith.subf %11, %21 : vector<8x32xf32>
    %23 = arith.mulf %22, %22 : vector<8x32xf32>
    %cst_14 = arith.constant dense<0.000000e+00> : vector<8xf32>
    %24 = vector.multi_reduction <add>, %23, %cst_14 [1] : vector<8x32xf32> to vector<8xf32>
    %25 = vector.shape_cast %24 : vector<8xf32> to vector<8x1xf32>
    %cst_15 = arith.constant 3.200000e+01 : f32
    %26 = vector.broadcast %cst_15 : f32 to vector<8x1xf32>
    %27 = arith.divf %25, %26 : vector<8x1xf32>
    %cst_16 = arith.constant 1.000000e-07 : f32
    %28 = vector.broadcast %cst_16 : f32 to vector<8x1xf32>
    %29 = arith.addf %27, %28 : vector<8x1xf32>
    %30 = math.rsqrt %29 : vector<8x1xf32>
    %31 = vector.broadcast %30 : vector<8x1xf32> to vector<8x32xf32>
    %32 = arith.mulf %22, %31 : vector<8x32xf32>
    %33 = vector.broadcast %13 : vector<1x32xf32> to vector<8x32xf32>
    %34 = arith.mulf %32, %33 : vector<8x32xf32>
    %35 = vector.broadcast %14 : vector<1x32xf32> to vector<8x32xf32>
    %36 = arith.addf %34, %35 : vector<8x32xf32>
    %cst_17 = arith.constant dense<0.000000e+00> : vector<8xf32>
    %37 = vector.multi_reduction <add>, %12, %cst_17 [1] : vector<8x32xf32> to vector<8xf32>
    %38 = vector.shape_cast %37 : vector<8xf32> to vector<8x1xf32>
    %cst_18 = arith.constant 3.200000e+01 : f32
    %39 = vector.broadcast %cst_18 : f32 to vector<8x1xf32>
    %40 = arith.divf %38, %39 : vector<8x1xf32>
    %41 = vector.broadcast %40 : vector<8x1xf32> to vector<8x32xf32>
    %42 = arith.subf %12, %41 : vector<8x32xf32>
    %43 = arith.mulf %42, %42 : vector<8x32xf32>
    %cst_19 = arith.constant dense<0.000000e+00> : vector<8xf32>
    %44 = vector.multi_reduction <add>, %43, %cst_19 [1] : vector<8x32xf32> to vector<8xf32>
    %45 = vector.shape_cast %44 : vector<8xf32> to vector<8x1xf32>
    %cst_20 = arith.constant 3.200000e+01 : f32
    %46 = vector.broadcast %cst_20 : f32 to vector<8x1xf32>
    %47 = arith.divf %45, %46 : vector<8x1xf32>
    %cst_21 = arith.constant 1.000000e-07 : f32
    %48 = vector.broadcast %cst_21 : f32 to vector<8x1xf32>
    %49 = arith.addf %47, %48 : vector<8x1xf32>
    %50 = math.rsqrt %49 : vector<8x1xf32>
    %51 = vector.broadcast %50 : vector<8x1xf32> to vector<8x32xf32>
    %52 = arith.mulf %42, %51 : vector<8x32xf32>
    %53 = vector.broadcast %15 : vector<1x32xf32> to vector<8x32xf32>
    %54 = arith.mulf %52, %53 : vector<8x32xf32>
    %55 = vector.broadcast %16 : vector<1x32xf32> to vector<8x32xf32>
    %56 = arith.addf %54, %55 : vector<8x32xf32>
    %cst_22 = arith.constant dense<0.000000e+00> : vector<8x8xf32>
    %57 = tpu.matmul %10, %36, %cst_22 {dimension_numbers = #tpu.dot_dimension_numbers<[1], [1], [0], [0], [0, 0, 1, 0], [], []>} : vector<8x32xf32>, vector<8x32xf32>, vector<8x8xf32> -> vector<8x8xf32>
    %cst_23 = arith.constant 0.000000e+00 : f32
    %58 = vector.broadcast %cst_23 : f32 to vector<8x8xf32>
    %59 = arith.select %9, %57, %58 : vector<8x8xi1>, vector<8x8xf32>
    %cst_24 = arith.constant dense<0.000000e+00> : vector<8x32xf32>
    %60 = tpu.matmul %59, %56, %cst_24 {dimension_numbers = #tpu.dot_dimension_numbers<[1], [0], [0], [1], [0, 0, 1, 1], [], []>} : vector<8x8xf32>, vector<8x32xf32>, vector<8x32xf32> -> vector<8x32xf32>
    %cst_25 = arith.constant 1.250000e-01 : f32
    %61 = vector.broadcast %cst_25 : f32 to vector<8x32xf32>
    %62 = arith.mulf %60, %61 : vector<8x32xf32>
    %cst_26 = arith.constant dense<0.000000e+00> : vector<8xf32>
    %63 = vector.multi_reduction <add>, %59, %cst_26 [1] : vector<8x8xf32> to vector<8xf32>
    %64 = vector.shape_cast %63 : vector<8xf32> to vector<8x1xf32>
    %cst_27 = arith.constant dense<0.000000e+00> : vector<8xf32>
    %65 = vector.multi_reduction <add>, %10, %cst_27 [1] : vector<8x32xf32> to vector<8xf32>
    %66 = vector.shape_cast %65 : vector<8xf32> to vector<8x1xf32>
    %cst_28 = arith.constant 1.000000e-07 : f32
    %67 = vector.broadcast %cst_28 : f32 to vector<8x1xf32>
    %68 = arith.mulf %67, %66 : vector<8x1xf32>
    %69 = arith.addf %64, %68 : vector<8x1xf32>
    %70 = tpu.reciprocal %69 {approx = true} : vector<8x1xf32> -> vector<8x1xf32>
    %71 = vector.broadcast %70 : vector<8x1xf32> to vector<8x32xf32>
    %72 = arith.mulf %62, %71 : vector<8x32xf32>
    %73 = vector.extract_strided_slice %4 {offsets = [0, 32], sizes = [8, 32], strides = [1, 1]} : vector<8x128xf32> to vector<8x32xf32>
    %74 = vector.extract_strided_slice %5 {offsets = [0, 32], sizes = [8, 32], strides = [1, 1]} : vector<8x128xf32> to vector<8x32xf32>
    %75 = vector.extract_strided_slice %6 {offsets = [0, 32], sizes = [8, 32], strides = [1, 1]} : vector<8x128xf32> to vector<8x32xf32>
    %c1 = arith.constant 1 : index
    %c0_29 = arith.constant 0 : index
    %76 = vector.load %arg3[%c1, %c0_29] : memref<4x32xf32, #tpu.memory_space<vmem>>, vector<1x32xf32>
    %c1_30 = arith.constant 1 : index
    %c0_31 = arith.constant 0 : index
    %77 = vector.load %arg4[%c1_30, %c0_31] : memref<4x32xf32, #tpu.memory_space<vmem>>, vector<1x32xf32>
    %c1_32 = arith.constant 1 : index
    %c0_33 = arith.constant 0 : index
    %78 = vector.load %arg5[%c1_32, %c0_33] : memref<4x32xf32, #tpu.memory_space<vmem>>, vector<1x32xf32>
    %c1_34 = arith.constant 1 : index
    %c0_35 = arith.constant 0 : index
    %79 = vector.load %arg6[%c1_34, %c0_35] : memref<4x32xf32, #tpu.memory_space<vmem>>, vector<1x32xf32>
    %cst_36 = arith.constant dense<0.000000e+00> : vector<8xf32>
    %80 = vector.multi_reduction <add>, %74, %cst_36 [1] : vector<8x32xf32> to vector<8xf32>
    %81 = vector.shape_cast %80 : vector<8xf32> to vector<8x1xf32>
    %cst_37 = arith.constant 3.200000e+01 : f32
    %82 = vector.broadcast %cst_37 : f32 to vector<8x1xf32>
    %83 = arith.divf %81, %82 : vector<8x1xf32>
    %84 = vector.broadcast %83 : vector<8x1xf32> to vector<8x32xf32>
    %85 = arith.subf %74, %84 : vector<8x32xf32>
    %86 = arith.mulf %85, %85 : vector<8x32xf32>
    %cst_38 = arith.constant dense<0.000000e+00> : vector<8xf32>
    %87 = vector.multi_reduction <add>, %86, %cst_38 [1] : vector<8x32xf32> to vector<8xf32>
    %88 = vector.shape_cast %87 : vector<8xf32> to vector<8x1xf32>
    %cst_39 = arith.constant 3.200000e+01 : f32
    %89 = vector.broadcast %cst_39 : f32 to vector<8x1xf32>
    %90 = arith.divf %88, %89 : vector<8x1xf32>
    %cst_40 = arith.constant 1.000000e-07 : f32
    %91 = vector.broadcast %cst_40 : f32 to vector<8x1xf32>
    %92 = arith.addf %90, %91 : vector<8x1xf32>
    %93 = math.rsqrt %92 : vector<8x1xf32>
    %94 = vector.broadcast %93 : vector<8x1xf32> to vector<8x32xf32>
    %95 = arith.mulf %85, %94 : vector<8x32xf32>
    %96 = vector.broadcast %76 : vector<1x32xf32> to vector<8x32xf32>
    %97 = arith.mulf %95, %96 : vector<8x32xf32>
    %98 = vector.broadcast %77 : vector<1x32xf32> to vector<8x32xf32>
    %99 = arith.addf %97, %98 : vector<8x32xf32>
    %cst_41 = arith.constant dense<0.000000e+00> : vector<8xf32>
    %100 = vector.multi_reduction <add>, %75, %cst_41 [1] : vector<8x32xf32> to vector<8xf32>
    %101 = vector.shape_cast %100 : vector<8xf32> to vector<8x1xf32>
    %cst_42 = arith.constant 3.200000e+01 : f32
    %102 = vector.broadcast %cst_42 : f32 to vector<8x1xf32>
    %103 = arith.divf %101, %102 : vector<8x1xf32>
    %104 = vector.broadcast %103 : vector<8x1xf32> to vector<8x32xf32>
    %105 = arith.subf %75, %104 : vector<8x32xf32>
    %106 = arith.mulf %105, %105 : vector<8x32xf32>
    %cst_43 = arith.constant dense<0.000000e+00> : vector<8xf32>
    %107 = vector.multi_reduction <add>, %106, %cst_43 [1] : vector<8x32xf32> to vector<8xf32>
    %108 = vector.shape_cast %107 : vector<8xf32> to vector<8x1xf32>
    %cst_44 = arith.constant 3.200000e+01 : f32
    %109 = vector.broadcast %cst_44 : f32 to vector<8x1xf32>
    %110 = arith.divf %108, %109 : vector<8x1xf32>
    %cst_45 = arith.constant 1.000000e-07 : f32
    %111 = vector.broadcast %cst_45 : f32 to vector<8x1xf32>
    %112 = arith.addf %110, %111 : vector<8x1xf32>
    %113 = math.rsqrt %112 : vector<8x1xf32>
    %114 = vector.broadcast %113 : vector<8x1xf32> to vector<8x32xf32>
    %115 = arith.mulf %105, %114 : vector<8x32xf32>
    %116 = vector.broadcast %78 : vector<1x32xf32> to vector<8x32xf32>
    %117 = arith.mulf %115, %116 : vector<8x32xf32>
    %118 = vector.broadcast %79 : vector<1x32xf32> to vector<8x32xf32>
    %119 = arith.addf %117, %118 : vector<8x32xf32>
    %cst_46 = arith.constant dense<0.000000e+00> : vector<8x8xf32>
    %120 = tpu.matmul %73, %99, %cst_46 {dimension_numbers = #tpu.dot_dimension_numbers<[1], [1], [0], [0], [0, 0, 1, 0], [], []>} : vector<8x32xf32>, vector<8x32xf32>, vector<8x8xf32> -> vector<8x8xf32>
    %cst_47 = arith.constant 0.000000e+00 : f32
    %121 = vector.broadcast %cst_47 : f32 to vector<8x8xf32>
    %122 = arith.select %9, %120, %121 : vector<8x8xi1>, vector<8x8xf32>
    %cst_48 = arith.constant dense<0.000000e+00> : vector<8x32xf32>
    %123 = tpu.matmul %122, %119, %cst_48 {dimension_numbers = #tpu.dot_dimension_numbers<[1], [0], [0], [1], [0, 0, 1, 1], [], []>} : vector<8x8xf32>, vector<8x32xf32>, vector<8x32xf32> -> vector<8x32xf32>
    %cst_49 = arith.constant 1.250000e-01 : f32
    %124 = vector.broadcast %cst_49 : f32 to vector<8x32xf32>
    %125 = arith.mulf %123, %124 : vector<8x32xf32>
    %cst_50 = arith.constant dense<0.000000e+00> : vector<8xf32>
    %126 = vector.multi_reduction <add>, %122, %cst_50 [1] : vector<8x8xf32> to vector<8xf32>
    %127 = vector.shape_cast %126 : vector<8xf32> to vector<8x1xf32>
    %cst_51 = arith.constant dense<0.000000e+00> : vector<8xf32>
    %128 = vector.multi_reduction <add>, %73, %cst_51 [1] : vector<8x32xf32> to vector<8xf32>
    %129 = vector.shape_cast %128 : vector<8xf32> to vector<8x1xf32>
    %cst_52 = arith.constant 1.000000e-07 : f32
    %130 = vector.broadcast %cst_52 : f32 to vector<8x1xf32>
    %131 = arith.mulf %130, %129 : vector<8x1xf32>
    %132 = arith.addf %127, %131 : vector<8x1xf32>
    %133 = tpu.reciprocal %132 {approx = true} : vector<8x1xf32> -> vector<8x1xf32>
    %134 = vector.broadcast %133 : vector<8x1xf32> to vector<8x32xf32>
    %135 = arith.mulf %125, %134 : vector<8x32xf32>
    %136 = vector.extract_strided_slice %4 {offsets = [0, 64], sizes = [8, 32], strides = [1, 1]} : vector<8x128xf32> to vector<8x32xf32>
    %137 = vector.extract_strided_slice %5 {offsets = [0, 64], sizes = [8, 32], strides = [1, 1]} : vector<8x128xf32> to vector<8x32xf32>
    %138 = vector.extract_strided_slice %6 {offsets = [0, 64], sizes = [8, 32], strides = [1, 1]} : vector<8x128xf32> to vector<8x32xf32>
    %c2 = arith.constant 2 : index
    %c0_53 = arith.constant 0 : index
    %139 = vector.load %arg3[%c2, %c0_53] : memref<4x32xf32, #tpu.memory_space<vmem>>, vector<1x32xf32>
    %c2_54 = arith.constant 2 : index
    %c0_55 = arith.constant 0 : index
    %140 = vector.load %arg4[%c2_54, %c0_55] : memref<4x32xf32, #tpu.memory_space<vmem>>, vector<1x32xf32>
    %c2_56 = arith.constant 2 : index
    %c0_57 = arith.constant 0 : index
    %141 = vector.load %arg5[%c2_56, %c0_57] : memref<4x32xf32, #tpu.memory_space<vmem>>, vector<1x32xf32>
    %c2_58 = arith.constant 2 : index
    %c0_59 = arith.constant 0 : index
    %142 = vector.load %arg6[%c2_58, %c0_59] : memref<4x32xf32, #tpu.memory_space<vmem>>, vector<1x32xf32>
    %cst_60 = arith.constant dense<0.000000e+00> : vector<8xf32>
    %143 = vector.multi_reduction <add>, %137, %cst_60 [1] : vector<8x32xf32> to vector<8xf32>
    %144 = vector.shape_cast %143 : vector<8xf32> to vector<8x1xf32>
    %cst_61 = arith.constant 3.200000e+01 : f32
    %145 = vector.broadcast %cst_61 : f32 to vector<8x1xf32>
    %146 = arith.divf %144, %145 : vector<8x1xf32>
    %147 = vector.broadcast %146 : vector<8x1xf32> to vector<8x32xf32>
    %148 = arith.subf %137, %147 : vector<8x32xf32>
    %149 = arith.mulf %148, %148 : vector<8x32xf32>
    %cst_62 = arith.constant dense<0.000000e+00> : vector<8xf32>
    %150 = vector.multi_reduction <add>, %149, %cst_62 [1] : vector<8x32xf32> to vector<8xf32>
    %151 = vector.shape_cast %150 : vector<8xf32> to vector<8x1xf32>
    %cst_63 = arith.constant 3.200000e+01 : f32
    %152 = vector.broadcast %cst_63 : f32 to vector<8x1xf32>
    %153 = arith.divf %151, %152 : vector<8x1xf32>
    %cst_64 = arith.constant 1.000000e-07 : f32
    %154 = vector.broadcast %cst_64 : f32 to vector<8x1xf32>
    %155 = arith.addf %153, %154 : vector<8x1xf32>
    %156 = math.rsqrt %155 : vector<8x1xf32>
    %157 = vector.broadcast %156 : vector<8x1xf32> to vector<8x32xf32>
    %158 = arith.mulf %148, %157 : vector<8x32xf32>
    %159 = vector.broadcast %139 : vector<1x32xf32> to vector<8x32xf32>
    %160 = arith.mulf %158, %159 : vector<8x32xf32>
    %161 = vector.broadcast %140 : vector<1x32xf32> to vector<8x32xf32>
    %162 = arith.addf %160, %161 : vector<8x32xf32>
    %cst_65 = arith.constant dense<0.000000e+00> : vector<8xf32>
    %163 = vector.multi_reduction <add>, %138, %cst_65 [1] : vector<8x32xf32> to vector<8xf32>
    %164 = vector.shape_cast %163 : vector<8xf32> to vector<8x1xf32>
    %cst_66 = arith.constant 3.200000e+01 : f32
    %165 = vector.broadcast %cst_66 : f32 to vector<8x1xf32>
    %166 = arith.divf %164, %165 : vector<8x1xf32>
    %167 = vector.broadcast %166 : vector<8x1xf32> to vector<8x32xf32>
    %168 = arith.subf %138, %167 : vector<8x32xf32>
    %169 = arith.mulf %168, %168 : vector<8x32xf32>
    %cst_67 = arith.constant dense<0.000000e+00> : vector<8xf32>
    %170 = vector.multi_reduction <add>, %169, %cst_67 [1] : vector<8x32xf32> to vector<8xf32>
    %171 = vector.shape_cast %170 : vector<8xf32> to vector<8x1xf32>
    %cst_68 = arith.constant 3.200000e+01 : f32
    %172 = vector.broadcast %cst_68 : f32 to vector<8x1xf32>
    %173 = arith.divf %171, %172 : vector<8x1xf32>
    %cst_69 = arith.constant 1.000000e-07 : f32
    %174 = vector.broadcast %cst_69 : f32 to vector<8x1xf32>
    %175 = arith.addf %173, %174 : vector<8x1xf32>
    %176 = math.rsqrt %175 : vector<8x1xf32>
    %177 = vector.broadcast %176 : vector<8x1xf32> to vector<8x32xf32>
    %178 = arith.mulf %168, %177 : vector<8x32xf32>
    %179 = vector.broadcast %141 : vector<1x32xf32> to vector<8x32xf32>
    %180 = arith.mulf %178, %179 : vector<8x32xf32>
    %181 = vector.broadcast %142 : vector<1x32xf32> to vector<8x32xf32>
    %182 = arith.addf %180, %181 : vector<8x32xf32>
    %cst_70 = arith.constant dense<0.000000e+00> : vector<8x8xf32>
    %183 = tpu.matmul %136, %162, %cst_70 {dimension_numbers = #tpu.dot_dimension_numbers<[1], [1], [0], [0], [0, 0, 1, 0], [], []>} : vector<8x32xf32>, vector<8x32xf32>, vector<8x8xf32> -> vector<8x8xf32>
    %cst_71 = arith.constant 0.000000e+00 : f32
    %184 = vector.broadcast %cst_71 : f32 to vector<8x8xf32>
    %185 = arith.select %9, %183, %184 : vector<8x8xi1>, vector<8x8xf32>
    %cst_72 = arith.constant dense<0.000000e+00> : vector<8x32xf32>
    %186 = tpu.matmul %185, %182, %cst_72 {dimension_numbers = #tpu.dot_dimension_numbers<[1], [0], [0], [1], [0, 0, 1, 1], [], []>} : vector<8x8xf32>, vector<8x32xf32>, vector<8x32xf32> -> vector<8x32xf32>
    %cst_73 = arith.constant 1.250000e-01 : f32
    %187 = vector.broadcast %cst_73 : f32 to vector<8x32xf32>
    %188 = arith.mulf %186, %187 : vector<8x32xf32>
    %cst_74 = arith.constant dense<0.000000e+00> : vector<8xf32>
    %189 = vector.multi_reduction <add>, %185, %cst_74 [1] : vector<8x8xf32> to vector<8xf32>
    %190 = vector.shape_cast %189 : vector<8xf32> to vector<8x1xf32>
    %cst_75 = arith.constant dense<0.000000e+00> : vector<8xf32>
    %191 = vector.multi_reduction <add>, %136, %cst_75 [1] : vector<8x32xf32> to vector<8xf32>
    %192 = vector.shape_cast %191 : vector<8xf32> to vector<8x1xf32>
    %cst_76 = arith.constant 1.000000e-07 : f32
    %193 = vector.broadcast %cst_76 : f32 to vector<8x1xf32>
    %194 = arith.mulf %193, %192 : vector<8x1xf32>
    %195 = arith.addf %190, %194 : vector<8x1xf32>
    %196 = tpu.reciprocal %195 {approx = true} : vector<8x1xf32> -> vector<8x1xf32>
    %197 = vector.broadcast %196 : vector<8x1xf32> to vector<8x32xf32>
    %198 = arith.mulf %188, %197 : vector<8x32xf32>
    %199 = vector.extract_strided_slice %4 {offsets = [0, 96], sizes = [8, 32], strides = [1, 1]} : vector<8x128xf32> to vector<8x32xf32>
    %200 = vector.extract_strided_slice %5 {offsets = [0, 96], sizes = [8, 32], strides = [1, 1]} : vector<8x128xf32> to vector<8x32xf32>
    %201 = vector.extract_strided_slice %6 {offsets = [0, 96], sizes = [8, 32], strides = [1, 1]} : vector<8x128xf32> to vector<8x32xf32>
    %c3 = arith.constant 3 : index
    %c0_77 = arith.constant 0 : index
    %202 = vector.load %arg3[%c3, %c0_77] : memref<4x32xf32, #tpu.memory_space<vmem>>, vector<1x32xf32>
    %c3_78 = arith.constant 3 : index
    %c0_79 = arith.constant 0 : index
    %203 = vector.load %arg4[%c3_78, %c0_79] : memref<4x32xf32, #tpu.memory_space<vmem>>, vector<1x32xf32>
    %c3_80 = arith.constant 3 : index
    %c0_81 = arith.constant 0 : index
    %204 = vector.load %arg5[%c3_80, %c0_81] : memref<4x32xf32, #tpu.memory_space<vmem>>, vector<1x32xf32>
    %c3_82 = arith.constant 3 : index
    %c0_83 = arith.constant 0 : index
    %205 = vector.load %arg6[%c3_82, %c0_83] : memref<4x32xf32, #tpu.memory_space<vmem>>, vector<1x32xf32>
    %cst_84 = arith.constant dense<0.000000e+00> : vector<8xf32>
    %206 = vector.multi_reduction <add>, %200, %cst_84 [1] : vector<8x32xf32> to vector<8xf32>
    %207 = vector.shape_cast %206 : vector<8xf32> to vector<8x1xf32>
    %cst_85 = arith.constant 3.200000e+01 : f32
    %208 = vector.broadcast %cst_85 : f32 to vector<8x1xf32>
    %209 = arith.divf %207, %208 : vector<8x1xf32>
    %210 = vector.broadcast %209 : vector<8x1xf32> to vector<8x32xf32>
    %211 = arith.subf %200, %210 : vector<8x32xf32>
    %212 = arith.mulf %211, %211 : vector<8x32xf32>
    %cst_86 = arith.constant dense<0.000000e+00> : vector<8xf32>
    %213 = vector.multi_reduction <add>, %212, %cst_86 [1] : vector<8x32xf32> to vector<8xf32>
    %214 = vector.shape_cast %213 : vector<8xf32> to vector<8x1xf32>
    %cst_87 = arith.constant 3.200000e+01 : f32
    %215 = vector.broadcast %cst_87 : f32 to vector<8x1xf32>
    %216 = arith.divf %214, %215 : vector<8x1xf32>
    %cst_88 = arith.constant 1.000000e-07 : f32
    %217 = vector.broadcast %cst_88 : f32 to vector<8x1xf32>
    %218 = arith.addf %216, %217 : vector<8x1xf32>
    %219 = math.rsqrt %218 : vector<8x1xf32>
    %220 = vector.broadcast %219 : vector<8x1xf32> to vector<8x32xf32>
    %221 = arith.mulf %211, %220 : vector<8x32xf32>
    %222 = vector.broadcast %202 : vector<1x32xf32> to vector<8x32xf32>
    %223 = arith.mulf %221, %222 : vector<8x32xf32>
    %224 = vector.broadcast %203 : vector<1x32xf32> to vector<8x32xf32>
    %225 = arith.addf %223, %224 : vector<8x32xf32>
    %cst_89 = arith.constant dense<0.000000e+00> : vector<8xf32>
    %226 = vector.multi_reduction <add>, %201, %cst_89 [1] : vector<8x32xf32> to vector<8xf32>
    %227 = vector.shape_cast %226 : vector<8xf32> to vector<8x1xf32>
    %cst_90 = arith.constant 3.200000e+01 : f32
    %228 = vector.broadcast %cst_90 : f32 to vector<8x1xf32>
    %229 = arith.divf %227, %228 : vector<8x1xf32>
    %230 = vector.broadcast %229 : vector<8x1xf32> to vector<8x32xf32>
    %231 = arith.subf %201, %230 : vector<8x32xf32>
    %232 = arith.mulf %231, %231 : vector<8x32xf32>
    %cst_91 = arith.constant dense<0.000000e+00> : vector<8xf32>
    %233 = vector.multi_reduction <add>, %232, %cst_91 [1] : vector<8x32xf32> to vector<8xf32>
    %234 = vector.shape_cast %233 : vector<8xf32> to vector<8x1xf32>
    %cst_92 = arith.constant 3.200000e+01 : f32
    %235 = vector.broadcast %cst_92 : f32 to vector<8x1xf32>
    %236 = arith.divf %234, %235 : vector<8x1xf32>
    %cst_93 = arith.constant 1.000000e-07 : f32
    %237 = vector.broadcast %cst_93 : f32 to vector<8x1xf32>
    %238 = arith.addf %236, %237 : vector<8x1xf32>
    %239 = math.rsqrt %238 : vector<8x1xf32>
    %240 = vector.broadcast %239 : vector<8x1xf32> to vector<8x32xf32>
    %241 = arith.mulf %231, %240 : vector<8x32xf32>
    %242 = vector.broadcast %204 : vector<1x32xf32> to vector<8x32xf32>
    %243 = arith.mulf %241, %242 : vector<8x32xf32>
    %244 = vector.broadcast %205 : vector<1x32xf32> to vector<8x32xf32>
    %245 = arith.addf %243, %244 : vector<8x32xf32>
    %cst_94 = arith.constant dense<0.000000e+00> : vector<8x8xf32>
    %246 = tpu.matmul %199, %225, %cst_94 {dimension_numbers = #tpu.dot_dimension_numbers<[1], [1], [0], [0], [0, 0, 1, 0], [], []>} : vector<8x32xf32>, vector<8x32xf32>, vector<8x8xf32> -> vector<8x8xf32>
    %cst_95 = arith.constant 0.000000e+00 : f32
    %247 = vector.broadcast %cst_95 : f32 to vector<8x8xf32>
    %248 = arith.select %9, %246, %247 : vector<8x8xi1>, vector<8x8xf32>
    %cst_96 = arith.constant dense<0.000000e+00> : vector<8x32xf32>
    %249 = tpu.matmul %248, %245, %cst_96 {dimension_numbers = #tpu.dot_dimension_numbers<[1], [0], [0], [1], [0, 0, 1, 1], [], []>} : vector<8x8xf32>, vector<8x32xf32>, vector<8x32xf32> -> vector<8x32xf32>
    %cst_97 = arith.constant 1.250000e-01 : f32
    %250 = vector.broadcast %cst_97 : f32 to vector<8x32xf32>
    %251 = arith.mulf %249, %250 : vector<8x32xf32>
    %cst_98 = arith.constant dense<0.000000e+00> : vector<8xf32>
    %252 = vector.multi_reduction <add>, %248, %cst_98 [1] : vector<8x8xf32> to vector<8xf32>
    %253 = vector.shape_cast %252 : vector<8xf32> to vector<8x1xf32>
    %cst_99 = arith.constant dense<0.000000e+00> : vector<8xf32>
    %254 = vector.multi_reduction <add>, %199, %cst_99 [1] : vector<8x32xf32> to vector<8xf32>
    %255 = vector.shape_cast %254 : vector<8xf32> to vector<8x1xf32>
    %cst_100 = arith.constant 1.000000e-07 : f32
    %256 = vector.broadcast %cst_100 : f32 to vector<8x1xf32>
    %257 = arith.mulf %256, %255 : vector<8x1xf32>
    %258 = arith.addf %253, %257 : vector<8x1xf32>
    %259 = tpu.reciprocal %258 {approx = true} : vector<8x1xf32> -> vector<8x1xf32>
    %260 = vector.broadcast %259 : vector<8x1xf32> to vector<8x32xf32>
    %261 = arith.mulf %251, %260 : vector<8x32xf32>
    %262 = tpu.concatenate %72, %135, %198, %261 in 1 : vector<8x32xf32>, vector<8x32xf32>, vector<8x32xf32>, vector<8x32xf32> -> vector<8x128xf32>
    %c0_101 = arith.constant 0 : index
    %c0_102 = arith.constant 0 : index
    %263 = vector.load %arg7[%c0_101, %c0_102] : memref<128x32xf32, #tpu.memory_space<vmem>>, vector<128x32xf32>
    %cst_103 = arith.constant dense<0.000000e+00> : vector<8x32xf32>
    %264 = tpu.matmul %262, %263, %cst_103 {dimension_numbers = #tpu.dot_dimension_numbers<[1], [0], [0], [1], [0, 0, 1, 1], [], []>} : vector<8x128xf32>, vector<128x32xf32>, vector<8x32xf32> -> vector<8x32xf32>
    %c0_104 = arith.constant 0 : index
    %c0_105 = arith.constant 0 : index
    %265 = vector.load %arg8[%c0_104, %c0_105] : memref<1x32xf32, #tpu.memory_space<vmem>>, vector<1x32xf32>
    %266 = vector.broadcast %265 : vector<1x32xf32> to vector<8x32xf32>
    %267 = arith.addf %264, %266 : vector<8x32xf32>
    %c0_106 = arith.constant 0 : index
    %c0_107 = arith.constant 0 : index
    %c0_108 = arith.constant 0 : index
    %268 = vector.load %arg9[%c0_106, %c0_107, %c0_108] : memref<1x8x32xf32, #tpu.memory_space<vmem>>, vector<1x8x32xf32>
    %269 = vector.shape_cast %268 : vector<1x8x32xf32> to vector<8x32xf32>
    %270 = vector.shape_cast %267 : vector<8x32xf32> to vector<1x8x32xf32>
    tpu.vector_store %arg9[%c0_106, %c0_107, %c0_108], %270 {strides = array<i32>} : memref<1x8x32xf32, #tpu.memory_space<vmem>>, vector<1x8x32xf32>,
    return
  }
  func.func @transform_0(%arg0: i32) -> (i32, i32, i32) {
    %c0_i32 = arith.constant 0 : i32
    %c0_i32_0 = arith.constant 0 : i32
    %c0_i32_1 = arith.constant 0 : i32
    return %arg0, %c0_i32, %c0_i32_0 : i32, i32, i32
  }
  func.func @transform_1(%arg0: i32) -> (i32, i32) {
    %c0_i32 = arith.constant 0 : i32
    %c0_i32_0 = arith.constant 0 : i32
    %c0_i32_1 = arith.constant 0 : i32
    return %c0_i32, %c0_i32_0 : i32, i32
  }
  func.func @transform_2(%arg0: i32) -> (i32, i32) {
    %c0_i32 = arith.constant 0 : i32
    %c0_i32_0 = arith.constant 0 : i32
    %c0_i32_1 = arith.constant 0 : i32
    return %c0_i32, %c0_i32_0 : i32, i32
  }
  func.func @transform_3(%arg0: i32) -> (i32, i32) {
    %c0_i32 = arith.constant 0 : i32
    %c0_i32_0 = arith.constant 0 : i32
    %c0_i32_1 = arith.constant 0 : i32
    return %c0_i32, %c0_i32_0 : i32, i32
  }
  func.func @transform_4(%arg0: i32) -> (i32, i32) {
    %c0_i32 = arith.constant 0 : i32
    %c0_i32_0 = arith.constant 0 : i32
    %c0_i32_1 = arith.constant 0 : i32
    return %c0_i32, %c0_i32_0 : i32, i32
  }
  func.func @transform_5(%arg0: i32) -> (i32, i32) {
    %c0_i32 = arith.constant 0 : i32
    %c0_i32_0 = arith.constant 0 : i32
    %c0_i32_1 = arith.constant 0 : i32
    return %c0_i32, %c0_i32_0 : i32, i32
  }
  func.func @transform_6(%arg0: i32) -> (i32, i32) {
    %c0_i32 = arith.constant 0 : i32
    %c0_i32_0 = arith.constant 0 : i32
    %c0_i32_1 = arith.constant 0 : i32
    return %c0_i32, %c0_i32_0 : i32, i32
  }
  func.func @transform_7(%arg0: i32) -> (i32, i32) {
    %c0_i32 = arith.constant 0 : i32
    %c0_i32_0 = arith.constant 0 : i32
    %c0_i32_1 = arith.constant 0 : i32
    return %c0_i32, %c0_i32_0 : i32, i32
  }
  func.func @transform_8(%arg0: i32) -> (i32, i32, i32) {
    %c0_i32 = arith.constant 0 : i32
    %c0_i32_0 = arith.constant 0 : i32
    %c0_i32_1 = arith.constant 0 : i32
    return %arg0, %c0_i32, %c0_i32_0 : i32, i32, i32
  }
}

</mosaic_0001>

<llo_original>
// kernel: tpu_custom_call.1
$region0: #{tpu_custom_call.1}
  #allocation0 [shape = 'u32[]', space=smem, size = 0x4, offset = 0x4, fixed_abs, tag = 'smem constant byte address 0x4 - core index']
  #allocation1 [shape = 'u32[144,128]{1,0:T(1,128)}', space=vmem, size = 0x12000, scoped, tag = 'internal scratch']
  %s0 = inlined_call_operand.vmem [shape: f32[2,8,32], index: 0, kind: input, shape index: {}]
  %s1 = inlined_call_operand.vmem [shape: f32[32,384], index: 1, kind: input, shape index: {}]
  %s2 = inlined_call_operand.vmem [shape: f32[4,32], index: 2, kind: input, shape index: {}]
  %s3 = inlined_call_operand.vmem [shape: f32[4,32], index: 3, kind: input, shape index: {}]
  %s4 = inlined_call_operand.vmem [shape: f32[4,32], index: 4, kind: input, shape index: {}]
  %s5 = inlined_call_operand.vmem [shape: f32[4,32], index: 5, kind: input, shape index: {}]
  %s6 = inlined_call_operand.vmem [shape: f32[128,32], index: 6, kind: input, shape index: {}]
  %s7 = inlined_call_operand.vmem [shape: f32[1,32], index: 7, kind: input, shape index: {}]
  %s8 = inlined_call_operand.hbm [shape: f32[2,8,32], index: 8, kind: output, shape index: {}]
  %s9 = sld [smem:[#allocation0]]
  $region65: #{tpu_custom_call.1} parent=0
    _
  %s11 = ssub.s32 1, %s9
  %s12 = scalar_select 0, %s11, %s9
  $region1: #{tpu_custom_call.1} parent=0
    #allocation2 [shape = 'u8[8192]{0}', space=vmem, size = 0x2000, scoped, tag = 'output window, operand 0']
    #allocation3 [shape = 's32[2]{0}', space=sflag, size = 0x8, scoped, tag = 'scoped memory for tpu_custom_call.1']
    %13 = vsyncpa [#allocation3], 0
    %s14 = scalar_lea.sflag [#allocation3], 1
    %15 = vsyncpa %s14, 0
    loop: start=0, step=1, limit=4
    $region2: #{tpu_custom_call.1} parent=1 // loop_pre_header
      _
    $region3: #{tpu_custom_call.1} parent=1 // loop_header
      %s17 = sphi 0, %s21
      %p18 = scmp.ge.s32.totalorder %s17, 4
      %s27 = sphi 0, %s29
      %s30 = sphi 0, %s27
      %s31 = sphi 0, %s30
      %s47 = sphi 0, %s31
      %s51 = sphi 0, %s51
      %s53 = sphi 0, %s51
      %s54 = sphi 0, %s53
      %s68 = sphi 0, %s54
      %s72 = sphi 0, %s72
      %s74 = sphi 0, %s72
      %s75 = sphi 0, %s74
      %s89 = sphi 0, %s75
      %s93 = sphi 0, %s93
      %s95 = sphi 0, %s93
      %s96 = sphi 0, %s95
      %s110 = sphi 0, %s96
      %s114 = sphi 0, %s114
      %s116 = sphi 0, %s114
      %s117 = sphi 0, %s116
      %s131 = sphi 0, %s117
      %s135 = sphi 0, %s135
      %s137 = sphi 0, %s135
      %s138 = sphi 0, %s137
      %s152 = sphi 0, %s138
      %s156 = sphi 0, %s156
      %s158 = sphi 0, %s156
      %s159 = sphi 0, %s158
      %s173 = sphi 0, %s159
      %s177 = sphi 0, %s177
      %s179 = sphi 0, %s177
      %s180 = sphi 0, %s179
      %s194 = sphi 0, %s180
      %s200 = sphi 0, %s202
      %s203 = sphi 0, %s200
      %s204 = sphi 0, %s203
      %s220 = sphi 0, %s204
    $region4: #{tpu_custom_call.1} parent=1 // loop_header_branch
      %20 = sbr.rel (%p18) target = $region8
    $region5: #{tpu_custom_call.1} parent=1 // loop_body
      %s22 = ssub.s32 %s17, 1
      %s23 = ssub.s32 %s17, 2
      %s24 = sadd.s32 %s17, 1
      %s25 = ssub.s32 %s17, %s24
      %p26 = scmp.eq.s32.totalorder %s25, 0
      %s28 = sadd.s32 %s27, 1
      %s29 = scalar_select %p26, %s27, %s28
      %p32 = pneg %p26
      %p33 = scmp.eq.s32.totalorder %s17, 1
      %p34 = por %p32, %p33
      %p35 = scmp.ne.s32.totalorder %s27, %s30
      %p36 = scmp.eq.s32.totalorder %s17, 0
      %p37 = por %p35, %p36
      %p38 = scmp.ne.s32.totalorder %s27, %s30
      %p39 = scmp.eq.s32.totalorder %s22, 1
      %p40 = por %p38, %p39
      %p41 = scmp.ne.s32.totalorder %s30, %s31
      %p42 = scmp.eq.s32.totalorder %s22, 0
      %p43 = por %p41, %p42
      %p44 = scmp.ne.s32.totalorder %s30, %s31
      %p45 = scmp.eq.s32.totalorder %s23, 1
      %p46 = por %p44, %p45
      %p48 = scmp.ne.s32.totalorder %s31, %s47
      %p49 = scmp.eq.s32.totalorder %s23, 0
      %p50 = por %p48, %p49
      %s52 = sadd.s32 %s51, 1
      %p55 = scmp.eq.s32.totalorder %s17, 1
      %p56 = scmp.ne.s32.totalorder %s51, %s53
      %p57 = scmp.eq.s32.totalorder %s17, 0
      %p58 = por %p56, %p57
      %p59 = scmp.ne.s32.totalorder %s51, %s53
      %p60 = scmp.eq.s32.totalorder %s22, 1
      %p61 = por %p59, %p60
      %p62 = scmp.ne.s32.totalorder %s53, %s54
      %p63 = scmp.eq.s32.totalorder %s22, 0
      %p64 = por %p62, %p63
      %p65 = scmp.ne.s32.totalorder %s53, %s54
      %p66 = scmp.eq.s32.totalorder %s23, 1
      %p67 = por %p65, %p66
      %p69 = scmp.ne.s32.totalorder %s54, %s68
      %p70 = scmp.eq.s32.totalorder %s23, 0
      %p71 = por %p69, %p70
      %s73 = sadd.s32 %s72, 1
      %p76 = scmp.eq.s32.totalorder %s17, 1
      %p77 = scmp.ne.s32.totalorder %s72, %s74
      %p78 = scmp.eq.s32.totalorder %s17, 0
      %p79 = por %p77, %p78
      %p80 = scmp.ne.s32.totalorder %s72, %s74
      %p81 = scmp.eq.s32.totalorder %s22, 1
      %p82 = por %p80, %p81
      %p83 = scmp.ne.s32.totalorder %s74, %s75
      %p84 = scmp.eq.s32.totalorder %s22, 0
      %p85 = por %p83, %p84
      %p86 = scmp.ne.s32.totalorder %s74, %s75
      %p87 = scmp.eq.s32.totalorder %s23, 1
      %p88 = por %p86, %p87
      %p90 = scmp.ne.s32.totalorder %s75, %s89
      %p91 = scmp.eq.s32.totalorder %s23, 0
      %p92 = por %p90, %p91
      %s94 = sadd.s32 %s93, 1
      %p97 = scmp.eq.s32.totalorder %s17, 1
      %p98 = scmp.ne.s32.totalorder %s93, %s95
      %p99 = scmp.eq.s32.totalorder %s17, 0
      %p100 = por %p98, %p99
      %p101 = scmp.ne.s32.totalorder %s93, %s95
      %p102 = scmp.eq.s32.totalorder %s22, 1
      %p103 = por %p101, %p102
      %p104 = scmp.ne.s32.totalorder %s95, %s96
      %p105 = scmp.eq.s32.totalorder %s22, 0
      %p106 = por %p104, %p105
      %p107 = scmp.ne.s32.totalorder %s95, %s96
      %p108 = scmp.eq.s32.totalorder %s23, 1
      %p109 = por %p107, %p108
      %p111 = scmp.ne.s32.totalorder %s96, %s110
      %p112 = scmp.eq.s32.totalorder %s23, 0
      %p113 = por %p111, %p112
      %s115 = sadd.s32 %s114, 1
      %p118 = scmp.eq.s32.totalorder %s17, 1
      %p119 = scmp.ne.s32.totalorder %s114, %s116
      %p120 = scmp.eq.s32.totalorder %s17, 0
      %p121 = por %p119, %p120
      %p122 = scmp.ne.s32.totalorder %s114, %s116
      %p123 = scmp.eq.s32.totalorder %s22, 1
      %p124 = por %p122, %p123
      %p125 = scmp.ne.s32.totalorder %s116, %s117
      %p126 = scmp.eq.s32.totalorder %s22, 0
      %p127 = por %p125, %p126
      %p128 = scmp.ne.s32.totalorder %s116, %s117
      %p129 = scmp.eq.s32.totalorder %s23, 1
      %p130 = por %p128, %p129
      %p132 = scmp.ne.s32.totalorder %s117, %s131
      %p133 = scmp.eq.s32.totalorder %s23, 0
      %p134 = por %p132, %p133
      %s136 = sadd.s32 %s135, 1
      %p139 = scmp.eq.s32.totalorder %s17, 1
      %p140 = scmp.ne.s32.totalorder %s135, %s137
      %p141 = scmp.eq.s32.totalorder %s17, 0
      %p142 = por %p140, %p141
      %p143 = scmp.ne.s32.totalorder %s135, %s137
      %p144 = scmp.eq.s32.totalorder %s22, 1
      %p145 = por %p143, %p144
      %p146 = scmp.ne.s32.totalorder %s137, %s138
      %p147 = scmp.eq.s32.totalorder %s22, 0
      %p148 = por %p146, %p147
      %p149 = scmp.ne.s32.totalorder %s137, %s138
      %p150 = scmp.eq.s32.totalorder %s23, 1
      %p151 = por %p149, %p150
      %p153 = scmp.ne.s32.totalorder %s138, %s152
      %p154 = scmp.eq.s32.totalorder %s23, 0
      %p155 = por %p153, %p154
      %s157 = sadd.s32 %s156, 1
      %p160 = scmp.eq.s32.totalorder %s17, 1
      %p161 = scmp.ne.s32.totalorder %s156, %s158
      %p162 = scmp.eq.s32.totalorder %s17, 0
      %p163 = por %p161, %p162
      %p164 = scmp.ne.s32.totalorder %s156, %s158
      %p165 = scmp.eq.s32.totalorder %s22, 1
      %p166 = por %p164, %p165
      %p167 = scmp.ne.s32.totalorder %s158, %s159
      %p168 = scmp.eq.s32.totalorder %s22, 0
      %p169 = por %p167, %p168
      %p170 = scmp.ne.s32.totalorder %s158, %s159
      %p171 = scmp.eq.s32.totalorder %s23, 1
      %p172 = por %p170, %p171
      %p174 = scmp.ne.s32.totalorder %s159, %s173
      %p175 = scmp.eq.s32.totalorder %s23, 0
      %p176 = por %p174, %p175
      %s178 = sadd.s32 %s177, 1
      %p181 = scmp.eq.s32.totalorder %s17, 1
      %p182 = scmp.ne.s32.totalorder %s177, %s179
      %p183 = scmp.eq.s32.totalorder %s17, 0
      %p184 = por %p182, %p183
      %p185 = scmp.ne.s32.totalorder %s177, %s179
      %p186 = scmp.eq.s32.totalorder %s22, 1
      %p187 = por %p185, %p186
      %p188 = scmp.ne.s32.totalorder %s179, %s180
      %p189 = scmp.eq.s32.totalorder %s22, 0
      %p190 = por %p188, %p189
      %p191 = scmp.ne.s32.totalorder %s179, %s180
      %p192 = scmp.eq.s32.totalorder %s23, 1
      %p193 = por %p191, %p192
      %p195 = scmp.ne.s32.totalorder %s180, %s194
      %p196 = scmp.eq.s32.totalorder %s23, 0
      %p197 = por %p195, %p196
      %s198 = ssub.s32 %s17, %s24
      %p199 = scmp.eq.s32.totalorder %s198, 0
      %s201 = sadd.s32 %s200, 1
      %s202 = scalar_select %p199, %s200, %s201
      %p205 = pneg %p199
      %p206 = scmp.eq.s32.totalorder %s17, 1
      %p207 = por %p205, %p206
      %p208 = scmp.ne.s32.totalorder %s200, %s203
      %p209 = scmp.eq.s32.totalorder %s17, 0
      %p210 = por %p208, %p209
      %p211 = scmp.ne.s32.totalorder %s200, %s203
      %p212 = scmp.eq.s32.totalorder %s22, 1
      %p213 = por %p211, %p212
      %p214 = scmp.ne.s32.totalorder %s203, %s204
      %p215 = scmp.eq.s32.totalorder %s22, 0
      %p216 = por %p214, %p215
      %p217 = scmp.ne.s32.totalorder %s203, %s204
      %p218 = scmp.eq.s32.totalorder %s23, 1
      %p219 = por %p217, %p218
      %p221 = scmp.ne.s32.totalorder %s204, %s220
      %p222 = scmp.eq.s32.totalorder %s23, 0
      %p223 = por %p221, %p222
      %p224 = scmp.le.s32.totalorder 1, %s17
      %p225 = scmp.lt.s32.totalorder %s17, 3
      %p226 = pnand %p224, %p225
      %p227 = pneg %p226
      // Predicated region
      $region9: #{tpu_custom_call.1} parent=5 // pred_check
        _
      $region10: #{tpu_custom_call.1} parent=5 // pred_check_branch
        %229 = sbr.rel (%p226) target = $region12
      $region11: #{tpu_custom_call.1} parent=5 // pred_region
        %s230 = ssub.s32 %s17, 1
        // Predicated region
        $region13: #{tpu_custom_call.1} parent=11 // pred_check
          %p231 = pneg %p64
        $region14: #{tpu_custom_call.1} parent=11 // pred_check_branch
          %233 = sbr.rel (%p231) target = $region16
        $region15: #{tpu_custom_call.1} parent=11 // pred_region
          _
        $region16: #{tpu_custom_call.1} parent=11 // pred_fallthru
          _
        // Predicated region
        $region17: #{tpu_custom_call.1} parent=11 // pred_check
          %p234 = pneg %p85
        $region18: #{tpu_custom_call.1} parent=11 // pred_check_branch
          %236 = sbr.rel (%p234) target = $region20
        $region19: #{tpu_custom_call.1} parent=11 // pred_region
          _
        $region20: #{tpu_custom_call.1} parent=11 // pred_fallthru
          _
        // Predicated region
        $region21: #{tpu_custom_call.1} parent=11 // pred_check
          %p237 = pneg %p106
        $region22: #{tpu_custom_call.1} parent=11 // pred_check_branch
          %239 = sbr.rel (%p237) target = $region24
        $region23: #{tpu_custom_call.1} parent=11 // pred_region
          _
        $region24: #{tpu_custom_call.1} parent=11 // pred_fallthru
          _
        // Predicated region
        $region25: #{tpu_custom_call.1} parent=11 // pred_check
          %p240 = pneg %p127
        $region26: #{tpu_custom_call.1} parent=11 // pred_check_branch
          %242 = sbr.rel (%p240) target = $region28
        $region27: #{tpu_custom_call.1} parent=11 // pred_region
          _
        $region28: #{tpu_custom_call.1} parent=11 // pred_fallthru
          _
        // Predicated region
        $region29: #{tpu_custom_call.1} parent=11 // pred_check
          %p243 = pneg %p148
        $region30: #{tpu_custom_call.1} parent=11 // pred_check_branch
          %245 = sbr.rel (%p243) target = $region32
        $region31: #{tpu_custom_call.1} parent=11 // pred_region
          _
        $region32: #{tpu_custom_call.1} parent=11 // pred_fallthru
          _
        // Predicated region
        $region33: #{tpu_custom_call.1} parent=11 // pred_check
          %p246 = pneg %p169
        $region34: #{tpu_custom_call.1} parent=11 // pred_check_branch
          %248 = sbr.rel (%p246) target = $region36
        $region35: #{tpu_custom_call.1} parent=11 // pred_region
          _
        $region36: #{tpu_custom_call.1} parent=11 // pred_fallthru
          _
        // Predicated region
        $region37: #{tpu_custom_call.1} parent=11 // pred_check
          %p249 = pneg %p190
        $region38: #{tpu_custom_call.1} parent=11 // pred_check_branch
          %251 = sbr.rel (%p249) target = $region40
        $region39: #{tpu_custom_call.1} parent=11 // pred_region
          _
        $region40: #{tpu_custom_call.1} parent=11 // pred_fallthru
          _
      $region12: #{tpu_custom_call.1} parent=5 // pred_fallthru
        _
      %p252 = scmp.lt.s32.totalorder %s17, 2
      // Predicated region
      $region41: #{tpu_custom_call.1} parent=5 // pred_check
        %p253 = pneg %p252
      $region42: #{tpu_custom_call.1} parent=5 // pred_check_branch
        %255 = sbr.rel (%p253) target = $region44
      $region43: #{tpu_custom_call.1} parent=5 // pred_region
        // Predicated region
        $region45: #{tpu_custom_call.1} parent=43 // pred_check
          %p256 = pneg %p37
        $region46: #{tpu_custom_call.1} parent=43 // pred_check_branch
          %258 = sbr.rel (%p256) target = $region48
        $region47: #{tpu_custom_call.1} parent=43 // pred_region
          %p259 = scmp.lt.s32.totalorder %s17, 1
          %s260 = scalar_select %p259, %s17, 1
          %s261 = smul.addr %s260, 8
          %s262 = scalar_lea.vmem %s0, %s261
        $region48: #{tpu_custom_call.1} parent=43 // pred_fallthru
          _
      $region44: #{tpu_custom_call.1} parent=5 // pred_fallthru
        _
      %p263 = scmp.le.s32.totalorder 1, %s17
      %p264 = scmp.lt.s32.totalorder %s17, 3
      %p265 = pnand %p263, %p264
      %p266 = pneg %p265
      // Predicated region
      $region49: #{tpu_custom_call.1} parent=5 // pred_check
        _
      $region50: #{tpu_custom_call.1} parent=5 // pred_check_branch
        %268 = sbr.rel (%p265) target = $region52
      $region51: #{tpu_custom_call.1} parent=5 // pred_region
        %s269 = ssub.s32 %s17, 1
        %p270 = scmp.lt.s32.totalorder %s22, 1
        %s271 = scalar_select %p270, %s22, 1
        %s272 = smul.addr %s271, 8
        %s273 = scalar_lea.vmem %s0, %s272
        %p274 = pneg %p43
        %p275 = pneg %p40
        %p276 = pneg %p64
        %p277 = pneg %p61
        %p278 = pneg %p85
        %p279 = pneg %p82
        %p280 = pneg %p106
        %p281 = pneg %p103
        %p282 = pneg %p127
        %p283 = pneg %p124
        %p284 = pneg %p148
        %p285 = pneg %p145
        %p286 = pneg %p169
        %p287 = pneg %p166
        %p288 = pneg %p190
        %p289 = pneg %p187
        %p290 = pneg %p216
        %p291 = pneg %p213
        %s292 = sand.u32 %s203, 1
        %s293 = scalar_lea.sflag [#allocation3], %s292
        %s294 = sand.u32 %s203, 1
        %s295 = smul.addr %s294, 8
        %s296 = scalar_lea.vmem [#allocation2], %s295
        %p297 = scmp.lt.s32.totalorder %s22, 1
        %s298 = scalar_select %p297, %s22, 1
        %s299 = smul.addr %s298, 8
        %s300 = scalar_lea.vmem %s0, %s299
        %v301 = vld [vmem:[%s300] sm:$0xff]
        %v302 = vld [vmem:[%s1] sm:$0xff]
        %v303 = vld [vmem:[%s1 + $0x8] sm:$0xff]
        %v304 = vld [vmem:[%s1 + $0x10] sm:$0xff]
        %v305 = vld [vmem:[%s1 + $0x18] sm:$0xff]
        %v306 = vld [vmem:[%s1 + $0x20] sm:$0xff]
        %v307 = vld [vmem:[%s1 + $0x28] sm:$0xff]
        %v308 = vld [vmem:[%s1 + $0x30] sm:$0xff]
        %v309 = vld [vmem:[%s1 + $0x38] sm:$0xff]
        %v310 = vld [vmem:[%s1 + $0x40] sm:$0xff]
        %v311 = vld [vmem:[%s1 + $0x48] sm:$0xff]
        %v312 = vld [vmem:[%s1 + $0x50] sm:$0xff]
        %v313 = vld [vmem:[%s1 + $0x58] sm:$0xff]
        %vm314 = vcmask 261120
        %v316 = vsel %vm314, %v301, 0
        %318 = vmatprep.subr.mxu0 %v303
        %319 = vmatpush1.msra.mxu0 %v302
        %320 = vmatprep.subr.mxu0 %v306
        %321 = vmatpush1.msra.mxu0 %v305
        %322 = vmatprep.subr.mxu0 %v309
        %323 = vmatpush1.msra.mxu0 %v308
        %324 = vmatprep.subr.mxu0 %v312
        %325 = vmatpush1.msra.mxu0 %v311
        %326 = vmatprep.subr.mxu0 0.0
        %327 = vmatpush1.msra.mxu0 0.0
        %328 = vmatprep.subr.mxu0 0.0
        %329 = vmatpush1.msra.mxu0 0.0
        %330 = vmatprep.subr.mxu0 0.0
        %331 = vmatpush1.msra.mxu0 0.0
        %332 = vmatprep.subr.mxu0 0.0
        %333 = vmatpush1.msra.mxu0 0.0
        %334 = vmatprep.subr.mxu0 0.0
        %335 = vmatpush1.msra.mxu0 0.0
        %336 = vmatprep.subr.mxu0 0.0
        %337 = vmatpush1.msra.mxu0 0.0
        %338 = vmatprep.subr.mxu0 0.0
        %339 = vmatpush1.msra.mxu0 0.0
        %340 = vmatprep.subr.mxu0 0.0
        %341 = vmatpush1.msra.mxu0 0.0
        %342 = vmatprep.subr.mxu0 0.0
        %343 = vmatpush1.msra.mxu0 0.0
        %344 = vmatprep.subr.mxu0 0.0
        %345 = vmatpush1.msra.mxu0 0.0
        %346 = vmatprep.subr.mxu0 0.0
        %347 = vmatpush1.msra.mxu0 0.0
        %348 = vmatprep.subr.mxu0 0.0
        %349 = vmatpush1.msra.mxu0 0.0
        %350 = vmatprep.subr.mxu0 0.0
        %351 = vmatpush1.msra.mxu0 0.0
        %352 = vmatprep.subr.mxu0 0.0
        %353 = vmatpush1.msra.mxu0 0.0
        %354 = vmatprep.subr.mxu0 0.0
        %355 = vmatpush1.msra.mxu0 0.0
        %356 = vmatprep.subr.mxu0 0.0
        %357 = vmatpush1.msra.mxu0 0.0
        %358 = vmatprep.subr.mxu0 0.0
        %359 = vmatpush1.msra.mxu0 0.0
        %360 = vmatprep.subr.mxu0 0.0
        %361 = vmatpush1.msra.mxu0 0.0
        %362 = vmatprep.subr.mxu0 0.0
        %363 = vmatpush1.msra.mxu0 0.0
        %364 = vmatprep.subr.mxu0 0.0
        %365 = vmatpush1.msra.mxu0 0.0
        %366 = vmatprep.subr.mxu0 0.0
        %367 = vmatpush1.msra.mxu0 0.0
        %368 = vmatprep.subr.mxu0 0.0
        %369 = vmatpush1.msra.mxu0 0.0
        %370 = vmatprep.subr.mxu0 0.0
        %371 = vmatpush1.msra.mxu0 0.0
        %372 = vmatprep.subr.mxu0 0.0
        %373 = vmatpush1.msra.mxu0 0.0
        %374 = vmatprep.subr.mxu0 0.0
        %375 = vmatpush1.msra.mxu0 0.0
        %376 = vmatprep.subr.mxu0 0.0
        %377 = vmatpush1.msra.mxu0 0.0
        %378 = vmatprep.subr.mxu0 0.0
        %379 = vmatpush1.msra.mxu0 0.0
        %380 = vmatprep.subr.mxu0 0.0
        %381 = vmatpush1.msra.mxu0 0.0
        %382 = vmatprep.mubr.f32.mxu0 0.0
        %383 = vmatmul.mubr.f32.gmra.mrb[0].mxu0 %v316
        %v384 = vpop.f32.mrb[0].mxu0
        %v385 = vadd.f32 0.0, %v384
        %v386 = vpop.f32.mrb[0].mxu0
        %v387 = vadd.f32 0.0, %v386
        %388 = vdwg.mxu0
        %389 = vmatprep.subr.mxu0 0.0
        %390 = vmatpush1.msra.mxu0 %v304
        %391 = vmatprep.subr.mxu0 0.0
        %392 = vmatpush1.msra.mxu0 %v307
        %393 = vmatprep.subr.mxu0 0.0
        %394 = vmatpush1.msra.mxu0 %v310
        %395 = vmatprep.subr.mxu0 0.0
        %396 = vmatpush1.msra.mxu0 %v313
        %397 = vmatprep.subr.mxu0 0.0
        %398 = vmatpush1.msra.mxu0 0.0
        %399 = vmatprep.subr.mxu0 0.0
        %400 = vmatpush1.msra.mxu0 0.0
        %401 = vmatprep.subr.mxu0 0.0
        %402 = vmatpush1.msra.mxu0 0.0
        %403 = vmatprep.subr.mxu0 0.0
        %404 = vmatpush1.msra.mxu0 0.0
        %405 = vmatprep.subr.mxu0 0.0
        %406 = vmatpush1.msra.mxu0 0.0
        %407 = vmatprep.subr.mxu0 0.0
        %408 = vmatpush1.msra.mxu0 0.0
        %409 = vmatprep.subr.mxu0 0.0
        %410 = vmatpush1.msra.mxu0 0.0
        %411 = vmatprep.subr.mxu0 0.0
        %412 = vmatpush1.msra.mxu0 0.0
        %413 = vmatprep.subr.mxu0 0.0
        %414 = vmatpush1.msra.mxu0 0.0
        %415 = vmatprep.subr.mxu0 0.0
        %416 = vmatpush1.msra.mxu0 0.0
        %417 = vmatprep.subr.mxu0 0.0
        %418 = vmatpush1.msra.mxu0 0.0
        %419 = vmatprep.subr.mxu0 0.0
        %420 = vmatpush1.msra.mxu0 0.0
        %421 = vmatprep.subr.mxu0 0.0
        %422 = vmatpush1.msra.mxu0 0.0
        %423 = vmatprep.subr.mxu0 0.0
        %424 = vmatpush1.msra.mxu0 0.0
        %425 = vmatprep.subr.mxu0 0.0
        %426 = vmatpush1.msra.mxu0 0.0
        %427 = vmatprep.subr.mxu0 0.0
        %428 = vmatpush1.msra.mxu0 0.0
        %429 = vmatprep.subr.mxu0 0.0
        %430 = vmatpush1.msra.mxu0 0.0
        %431 = vmatprep.subr.mxu0 0.0
        %432 = vmatpush1.msra.mxu0 0.0
        %433 = vmatprep.subr.mxu0 0.0
        %434 = vmatpush1.msra.mxu0 0.0
        %435 = vmatprep.subr.mxu0 0.0
        %436 = vmatpush1.msra.mxu0 0.0
        %437 = vmatprep.subr.mxu0 0.0
        %438 = vmatpush1.msra.mxu0 0.0
        %439 = vmatprep.subr.mxu0 0.0
        %440 = vmatpush1.msra.mxu0 0.0
        %441 = vmatprep.subr.mxu0 0.0
        %442 = vmatpush1.msra.mxu0 0.0
        %443 = vmatprep.subr.mxu0 0.0
        %444 = vmatpush1.msra.mxu0 0.0
        %445 = vmatprep.subr.mxu0 0.0
        %446 = vmatpush1.msra.mxu0 0.0
        %447 = vmatprep.subr.mxu0 0.0
        %448 = vmatpush1.msra.mxu0 0.0
        %449 = vmatprep.subr.mxu0 0.0
        %450 = vmatpush1.msra.mxu0 0.0
        %451 = vmatprep.subr.mxu0 0.0
        %452 = vmatpush1.msra.mxu0 0.0
        %453 = vmatprep.mubr.f32.mxu0 0.0
        %454 = vmatmul.mubr.f32.gmra.mrb[0].mxu0 %v316
        %v455 = vpop.f32.mrb[0].mxu0
        %v456 = vadd.f32 0.0, %v455
        %v457 = vpop.f32.mrb[0].mxu0
        %458 = vdwg.mxu0
        %v459 = vlaneseq
        %v460 = vshrl.u32 %v459, 7
        %v461 = vlaneseq
        %v462 = vand.u32 %v461, 127
        %vm463 = vcmp.ge.s32.totalorder %v460, %v462
        %v464 = vld [vmem:[%s2] sm:$0x1]
        %v465 = vld [vmem:[%s3] sm:$0x1]
        %v466 = vld [vmem:[%s4] sm:$0x1]
        %v467 = vld [vmem:[%s5] sm:$0x1]
        %v468 = vsel %vm314, %v387, 0.0
        %469 = vadd.xlane.f32.xlu0 %v468
        %v470 = vpop.xlane.xlu0 %469
        %v471 = vrcp.pop 32.0
        %v472 = vmul.f32 %v470, %v471
        %v473 = vsub.f32 %v387, %v472
        %v474 = vmul.f32 %v473, %v473
        %v475 = vsel %vm314, %v474, 0.0
        %476 = vadd.xlane.f32.xlu0 %v475
        %v477 = vpop.xlane.xlu0 %476
        %v478 = vmul.f32 %v477, %v471
        %v479 = vadd.f32 %v478, 1e-07
        %v480 = vrsqrt.pop %v479
        %v481 = vmul.f32 %v473, %v480
        %v482 = vlaneseq
        %v483 = vshrl.u32 %v482, 7
        %v484 = vsub.s32 0, %v483
        %v485 = vrot.slane %v464, %v484
        %v486 = vmul.f32 %v481, %v485
        %v487 = vlaneseq
        %v488 = vshrl.u32 %v487, 7
        %v489 = vsub.s32 0, %v488
        %v490 = vrot.slane %v465, %v489
        %v491 = vadd.f32 %v486, %v490
        %v492 = vsel %vm314, %v456, 0.0
        %493 = vadd.xlane.f32.xlu0 %v492
        %v494 = vpop.xlane.xlu0 %493
        %v495 = vmul.f32 %v494, %v471
        %v496 = vsub.f32 %v456, %v495
        %v497 = vmul.f32 %v496, %v496
        %v498 = vsel %vm314, %v497, 0.0
        %499 = vadd.xlane.f32.xlu0 %v498
        %v500 = vpop.xlane.xlu0 %499
        %v501 = vmul.f32 %v500, %v471
        %v502 = vadd.f32 %v501, 1e-07
        %v503 = vrsqrt.pop %v502
        %v504 = vmul.f32 %v496, %v503
        %v505 = vlaneseq
        %v506 = vshrl.u32 %v505, 7
        %v507 = vsub.s32 0, %v506
        %v508 = vrot.slane %v466, %v507
        %v509 = vmul.f32 %v504, %v508
        %v510 = vlaneseq
        %v511 = vshrl.u32 %v510, 7
        %v512 = vsub.s32 0, %v511
        %v513 = vrot.slane %v467, %v512
        %v514 = vadd.f32 %v509, %v513
        %v516 = vsel %vm314, %v385, 0
        %v519 = vsel %vm314, %v491, 0
        %521 = vmatprep.subr.mxu0 0.0
        %522 = vmatpush1.xpose.msra.mxu0 %v519
        %523 = vmatprep.subr.mxu0 0.0
        %524 = vmatpush1.xpose.msra.mxu0 0.0
        %525 = vmatprep.subr.mxu0 0.0
        %526 = vmatpush1.xpose.msra.mxu0 0.0
        %527 = vmatprep.subr.mxu0 0.0
        %528 = vmatpush1.xpose.msra.mxu0 0.0
        %529 = vmatprep.subr.mxu0 0.0
        %530 = vmatpush1.xpose.msra.mxu0 0.0
        %531 = vmatprep.subr.mxu0 0.0
        %532 = vmatpush1.xpose.msra.mxu0 0.0
        %533 = vmatprep.subr.mxu0 0.0
        %534 = vmatpush1.xpose.msra.mxu0 0.0
        %535 = vmatprep.subr.mxu0 0.0
        %536 = vmatpush1.xpose.msra.mxu0 0.0
        %537 = vmatprep.subr.mxu0 0.0
        %538 = vmatpush1.xpose.msra.mxu0 0.0
        %539 = vmatprep.subr.mxu0 0.0
        %540 = vmatpush1.xpose.msra.mxu0 0.0
        %541 = vmatprep.subr.mxu0 0.0
        %542 = vmatpush1.xpose.msra.mxu0 0.0
        %543 = vmatprep.subr.mxu0 0.0
        %544 = vmatpush1.xpose.msra.mxu0 0.0
        %545 = vmatprep.subr.mxu0 0.0
        %546 = vmatpush1.xpose.msra.mxu0 0.0
        %547 = vmatprep.subr.mxu0 0.0
        %548 = vmatpush1.xpose.msra.mxu0 0.0
        %549 = vmatprep.subr.mxu0 0.0
        %550 = vmatpush1.xpose.msra.mxu0 0.0
        %551 = vmatprep.subr.mxu0 0.0
        %552 = vmatpush1.xpose.msra.mxu0 0.0
        %553 = vmatprep.subr.mxu0 0.0
        %554 = vmatpush1.xpose.msra.mxu0 0.0
        %555 = vmatprep.subr.mxu0 0.0
        %556 = vmatpush1.xpose.msra.mxu0 0.0
        %557 = vmatprep.subr.mxu0 0.0
        %558 = vmatpush1.xpose.msra.mxu0 0.0
        %559 = vmatprep.subr.mxu0 0.0
        %560 = vmatpush1.xpose.msra.mxu0 0.0
        %561 = vmatprep.subr.mxu0 0.0
        %562 = vmatpush1.xpose.msra.mxu0 0.0
        %563 = vmatprep.subr.mxu0 0.0
        %564 = vmatpush1.xpose.msra.mxu0 0.0
        %565 = vmatprep.subr.mxu0 0.0
        %566 = vmatpush1.xpose.msra.mxu0 0.0
        %567 = vmatprep.subr.mxu0 0.0
        %568 = vmatpush1.xpose.msra.mxu0 0.0
        %569 = vmatprep.subr.mxu0 0.0
        %570 = vmatpush1.xpose.msra.mxu0 0.0
        %571 = vmatprep.subr.mxu0 0.0
        %572 = vmatpush1.xpose.msra.mxu0 0.0
        %573 = vmatprep.subr.mxu0 0.0
        %574 = vmatpush1.xpose.msra.mxu0 0.0
        %575 = vmatprep.subr.mxu0 0.0
        %576 = vmatpush1.xpose.msra.mxu0 0.0
        %577 = vmatprep.subr.mxu0 0.0
        %578 = vmatpush1.xpose.msra.mxu0 0.0
        %579 = vmatprep.subr.mxu0 0.0
        %580 = vmatpush1.xpose.msra.mxu0 0.0
        %581 = vmatprep.subr.mxu0 0.0
        %582 = vmatpush1.xpose.msra.mxu0 0.0
        %583 = vmatprep.subr.mxu0 0.0
        %584 = vmatpush1.xpose.msra.mxu0 0.0
        %585 = vmatprep.mubr.f32.mxu0 0.0
        %586 = vmatmul.mubr.f32.gmra.mrb[0].mxu0 %v516
        %v587 = vpop.f32.mrb[0].mxu0
        %v588 = vadd.f32 0.0, %v587
        %v589 = vpop.f32.mrb[0].mxu0
        %590 = vdwg.mxu0
        %v591 = vsel %vm463, %v588, 0.0
        %vm592 = vcmask 64512
        %v594 = vsel %vm592, %v591, 0
        %596 = vmatprep.subr.mxu0 0.0
        %597 = vmatpush1.msra.mxu0 %v514
        %598 = vmatprep.subr.mxu0 0.0
        %599 = vmatpush1.msra.mxu0 0.0
        %600 = vmatprep.subr.mxu0 0.0
        %601 = vmatpush1.msra.mxu0 0.0
        %602 = vmatprep.subr.mxu0 0.0
        %603 = vmatpush1.msra.mxu0 0.0
        %604 = vmatprep.subr.mxu0 0.0
        %605 = vmatpush1.msra.mxu0 0.0
        %606 = vmatprep.subr.mxu0 0.0
        %607 = vmatpush1.msra.mxu0 0.0
        %608 = vmatprep.subr.mxu0 0.0
        %609 = vmatpush1.msra.mxu0 0.0
        %610 = vmatprep.subr.mxu0 0.0
        %611 = vmatpush1.msra.mxu0 0.0
        %612 = vmatprep.subr.mxu0 0.0
        %613 = vmatpush1.msra.mxu0 0.0
        %614 = vmatprep.subr.mxu0 0.0
        %615 = vmatpush1.msra.mxu0 0.0
        %616 = vmatprep.subr.mxu0 0.0
        %617 = vmatpush1.msra.mxu0 0.0
        %618 = vmatprep.subr.mxu0 0.0
        %619 = vmatpush1.msra.mxu0 0.0
        %620 = vmatprep.subr.mxu0 0.0
        %621 = vmatpush1.msra.mxu0 0.0
        %622 = vmatprep.subr.mxu0 0.0
        %623 = vmatpush1.msra.mxu0 0.0
        %624 = vmatprep.subr.mxu0 0.0
        %625 = vmatpush1.msra.mxu0 0.0
        %626 = vmatprep.subr.mxu0 0.0
        %627 = vmatpush1.msra.mxu0 0.0
        %628 = vmatprep.subr.mxu0 0.0
        %629 = vmatpush1.msra.mxu0 0.0
        %630 = vmatprep.subr.mxu0 0.0
        %631 = vmatpush1.msra.mxu0 0.0
        %632 = vmatprep.subr.mxu0 0.0
        %633 = vmatpush1.msra.mxu0 0.0
        %634 = vmatprep.subr.mxu0 0.0
        %635 = vmatpush1.msra.mxu0 0.0
        %636 = vmatprep.subr.mxu0 0.0
        %637 = vmatpush1.msra.mxu0 0.0
        %638 = vmatprep.subr.mxu0 0.0
        %639 = vmatpush1.msra.mxu0 0.0
        %640 = vmatprep.subr.mxu0 0.0
        %641 = vmatpush1.msra.mxu0 0.0
        %642 = vmatprep.subr.mxu0 0.0
        %643 = vmatpush1.msra.mxu0 0.0
        %644 = vmatprep.subr.mxu0 0.0
        %645 = vmatpush1.msra.mxu0 0.0
        %646 = vmatprep.subr.mxu0 0.0
        %647 = vmatpush1.msra.mxu0 0.0
        %648 = vmatprep.subr.mxu0 0.0
        %649 = vmatpush1.msra.mxu0 0.0
        %650 = vmatprep.subr.mxu0 0.0
        %651 = vmatpush1.msra.mxu0 0.0
        %652 = vmatprep.subr.mxu0 0.0
        %653 = vmatpush1.msra.mxu0 0.0
        %654 = vmatprep.subr.mxu0 0.0
        %655 = vmatpush1.msra.mxu0 0.0
        %656 = vmatprep.subr.mxu0 0.0
        %657 = vmatpush1.msra.mxu0 0.0
        %658 = vmatprep.subr.mxu0 0.0
        %659 = vmatpush1.msra.mxu0 0.0
        %660 = vmatprep.mubr.f32.mxu0 0.0
        %661 = vmatmul.mubr.f32.gmra.mrb[0].mxu0 %v594
        %v662 = vpop.f32.mrb[0].mxu0
        %v663 = vadd.f32 0.0, %v662
        %v664 = vpop.f32.mrb[0].mxu0
        %665 = vdwg.mxu0
        %v666 = vmul.f32 %v663, 0.125
        %v667 = vsel %vm592, %v591, 0.0
        %668 = vadd.xlane.f32.xlu0 %v667
        %v669 = vpop.xlane.xlu0 %668
        %v670 = vsel %vm314, %v385, 0.0
        %671 = vadd.xlane.f32.xlu0 %v670
        %v672 = vpop.xlane.xlu0 %671
        %v673 = vmul.f32 %v672, 1e-07
        %v674 = vadd.f32 %v669, %v673
        %v675 = vrcp.pop %v674
        %v676 = vmul.f32 %v666, %v675
        %v677 = vld [vmem:[%s2 + $0x1] sm:$0x1]
        %v678 = vld [vmem:[%s3 + $0x1] sm:$0x1]
        %v679 = vld [vmem:[%s4 + $0x1] sm:$0x1]
        %v680 = vld [vmem:[%s5 + $0x1] sm:$0x1]
        %682 = vrot.lane.b32.xlu0 %v387, 96
        %v683 = vpop.permute.xlu0 %682
        %v685 = vsel %vm314, %v683, 0.0
        %686 = vadd.xlane.f32.xlu0 %v685
        %v687 = vpop.xlane.xlu0 %686
        %v688 = vmul.f32 %v687, %v471
        %v689 = vsub.f32 %v387, %v688
        %v690 = vmul.f32 %v689, %v689
        %692 = vrot.lane.b32.xlu0 %v690, 96
        %v693 = vpop.permute.xlu0 %692
        %v695 = vsel %vm314, %v693, 0.0
        %696 = vadd.xlane.f32.xlu0 %v695
        %v697 = vpop.xlane.xlu0 %696
        %v698 = vmul.f32 %v697, %v471
        %v699 = vadd.f32 %v698, 1e-07
        %v700 = vrsqrt.pop %v699
        %v701 = vmul.f32 %v689, %v700
        %v702 = vlaneseq
        %v703 = vshrl.u32 %v702, 7
        %v704 = vsub.s32 0, %v703
        %v705 = vrot.slane %v677, %v704
        %707 = vrot.lane.b32.xlu0 %v705, 32
        %v708 = vpop.permute.xlu0 %707
        %v710 = vmul.f32 %v701, %v708
        %v711 = vlaneseq
        %v712 = vshrl.u32 %v711, 7
        %v713 = vsub.s32 0, %v712
        %v714 = vrot.slane %v678, %v713
        %716 = vrot.lane.b32.xlu0 %v714, 32
        %v717 = vpop.permute.xlu0 %716
        %v719 = vadd.f32 %v710, %v717
        %721 = vrot.lane.b32.xlu0 %v456, 96
        %v722 = vpop.permute.xlu0 %721
        %v724 = vsel %vm314, %v722, 0.0
        %725 = vadd.xlane.f32.xlu0 %v724
        %v726 = vpop.xlane.xlu0 %725
        %v727 = vmul.f32 %v726, %v471
        %v728 = vsub.f32 %v456, %v727
        %v729 = vmul.f32 %v728, %v728
        %731 = vrot.lane.b32.xlu0 %v729, 96
        %v732 = vpop.permute.xlu0 %731
        %v734 = vsel %vm314, %v732, 0.0
        %735 = vadd.xlane.f32.xlu0 %v734
        %v736 = vpop.xlane.xlu0 %735
        %v737 = vmul.f32 %v736, %v471
        %v738 = vadd.f32 %v737, 1e-07
        %v739 = vrsqrt.pop %v738
        %v740 = vmul.f32 %v728, %v739
        %v741 = vlaneseq
        %v742 = vshrl.u32 %v741, 7
        %v743 = vsub.s32 0, %v742
        %v744 = vrot.slane %v679, %v743
        %746 = vrot.lane.b32.xlu0 %v744, 32
        %v747 = vpop.permute.xlu0 %746
        %v749 = vmul.f32 %v740, %v747
        %v750 = vlaneseq
        %v751 = vshrl.u32 %v750, 7
        %v752 = vsub.s32 0, %v751
        %v753 = vrot.slane %v680, %v752
        %755 = vrot.lane.b32.xlu0 %v753, 32
        %v756 = vpop.permute.xlu0 %755
        %v758 = vadd.f32 %v749, %v756
        %759 = vrot.lane.b32.xlu0 %v385, 96
        %v760 = vpop.permute.xlu0 %759
        %762 = vrot.lane.b32.xlu0 %v719, 96
        %v763 = vpop.permute.xlu0 %762
        %v764 = vsel %vm314, %v760, 0
        %v766 = vsel %vm314, %v763, 0
        %768 = vmatprep.subr.mxu0 0.0
        %769 = vmatpush1.xpose.msra.mxu0 %v766
        %770 = vmatprep.subr.mxu0 0.0
        %771 = vmatpush1.xpose.msra.mxu0 0.0
        %772 = vmatprep.subr.mxu0 0.0
        %773 = vmatpush1.xpose.msra.mxu0 0.0
        %774 = vmatprep.subr.mxu0 0.0
        %775 = vmatpush1.xpose.msra.mxu0 0.0
        %776 = vmatprep.subr.mxu0 0.0
        %777 = vmatpush1.xpose.msra.mxu0 0.0
        %778 = vmatprep.subr.mxu0 0.0
        %779 = vmatpush1.xpose.msra.mxu0 0.0
        %780 = vmatprep.subr.mxu0 0.0
        %781 = vmatpush1.xpose.msra.mxu0 0.0
        %782 = vmatprep.subr.mxu0 0.0
        %783 = vmatpush1.xpose.msra.mxu0 0.0
        %784 = vmatprep.subr.mxu0 0.0
        %785 = vmatpush1.xpose.msra.mxu0 0.0
        %786 = vmatprep.subr.mxu0 0.0
        %787 = vmatpush1.xpose.msra.mxu0 0.0
        %788 = vmatprep.subr.mxu0 0.0
        %789 = vmatpush1.xpose.msra.mxu0 0.0
        %790 = vmatprep.subr.mxu0 0.0
        %791 = vmatpush1.xpose.msra.mxu0 0.0
        %792 = vmatprep.subr.mxu0 0.0
        %793 = vmatpush1.xpose.msra.mxu0 0.0
        %794 = vmatprep.subr.mxu0 0.0
        %795 = vmatpush1.xpose.msra.mxu0 0.0
        %796 = vmatprep.subr.mxu0 0.0
        %797 = vmatpush1.xpose.msra.mxu0 0.0
        %798 = vmatprep.subr.mxu0 0.0
        %799 = vmatpush1.xpose.msra.mxu0 0.0
        %800 = vmatprep.subr.mxu0 0.0
        %801 = vmatpush1.xpose.msra.mxu0 0.0
        %802 = vmatprep.subr.mxu0 0.0
        %803 = vmatpush1.xpose.msra.mxu0 0.0
        %804 = vmatprep.subr.mxu0 0.0
        %805 = vmatpush1.xpose.msra.mxu0 0.0
        %806 = vmatprep.subr.mxu0 0.0
        %807 = vmatpush1.xpose.msra.mxu0 0.0
        %808 = vmatprep.subr.mxu0 0.0
        %809 = vmatpush1.xpose.msra.mxu0 0.0
        %810 = vmatprep.subr.mxu0 0.0
        %811 = vmatpush1.xpose.msra.mxu0 0.0
        %812 = vmatprep.subr.mxu0 0.0
        %813 = vmatpush1.xpose.msra.mxu0 0.0
        %814 = vmatprep.subr.mxu0 0.0
        %815 = vmatpush1.xpose.msra.mxu0 0.0
        %816 = vmatprep.subr.mxu0 0.0
        %817 = vmatpush1.xpose.msra.mxu0 0.0
        %818 = vmatprep.subr.mxu0 0.0
        %819 = vmatpush1.xpose.msra.mxu0 0.0
        %820 = vmatprep.subr.mxu0 0.0
        %821 = vmatpush1.xpose.msra.mxu0 0.0
        %822 = vmatprep.subr.mxu0 0.0
        %823 = vmatpush1.xpose.msra.mxu0 0.0
        %824 = vmatprep.subr.mxu0 0.0
        %825 = vmatpush1.xpose.msra.mxu0 0.0
        %826 = vmatprep.subr.mxu0 0.0
        %827 = vmatpush1.xpose.msra.mxu0 0.0
        %828 = vmatprep.subr.mxu0 0.0
        %829 = vmatpush1.xpose.msra.mxu0 0.0
        %830 = vmatprep.subr.mxu0 0.0
        %831 = vmatpush1.xpose.msra.mxu0 0.0
        %832 = vmatprep.mubr.f32.mxu0 0.0
        %833 = vmatmul.mubr.f32.gmra.mrb[0].mxu0 %v764
        %v834 = vpop.f32.mrb[0].mxu0
        %v835 = vadd.f32 0.0, %v834
        %v836 = vpop.f32.mrb[0].mxu0
        %837 = vdwg.mxu0
        %v838 = vsel %vm463, %v835, 0.0
        %840 = vrot.lane.b32.xlu0 %v758, 96
        %v841 = vpop.permute.xlu0 %840
        %v844 = vsel %vm592, %v838, 0
        %846 = vmatprep.subr.mxu0 0.0
        %847 = vmatpush1.msra.mxu0 %v841
        %848 = vmatprep.subr.mxu0 0.0
        %849 = vmatpush1.msra.mxu0 0.0
        %850 = vmatprep.subr.mxu0 0.0
        %851 = vmatpush1.msra.mxu0 0.0
        %852 = vmatprep.subr.mxu0 0.0
        %853 = vmatpush1.msra.mxu0 0.0
        %854 = vmatprep.subr.mxu0 0.0
        %855 = vmatpush1.msra.mxu0 0.0
        %856 = vmatprep.subr.mxu0 0.0
        %857 = vmatpush1.msra.mxu0 0.0
        %858 = vmatprep.subr.mxu0 0.0
        %859 = vmatpush1.msra.mxu0 0.0
        %860 = vmatprep.subr.mxu0 0.0
        %861 = vmatpush1.msra.mxu0 0.0
        %862 = vmatprep.subr.mxu0 0.0
        %863 = vmatpush1.msra.mxu0 0.0
        %864 = vmatprep.subr.mxu0 0.0
        %865 = vmatpush1.msra.mxu0 0.0
        %866 = vmatprep.subr.mxu0 0.0
        %867 = vmatpush1.msra.mxu0 0.0
        %868 = vmatprep.subr.mxu0 0.0
        %869 = vmatpush1.msra.mxu0 0.0
        %870 = vmatprep.subr.mxu0 0.0
        %871 = vmatpush1.msra.mxu0 0.0
        %872 = vmatprep.subr.mxu0 0.0
        %873 = vmatpush1.msra.mxu0 0.0
        %874 = vmatprep.subr.mxu0 0.0
        %875 = vmatpush1.msra.mxu0 0.0
        %876 = vmatprep.subr.mxu0 0.0
        %877 = vmatpush1.msra.mxu0 0.0
        %878 = vmatprep.subr.mxu0 0.0
        %879 = vmatpush1.msra.mxu0 0.0
        %880 = vmatprep.subr.mxu0 0.0
        %881 = vmatpush1.msra.mxu0 0.0
        %882 = vmatprep.subr.mxu0 0.0
        %883 = vmatpush1.msra.mxu0 0.0
        %884 = vmatprep.subr.mxu0 0.0
        %885 = vmatpush1.msra.mxu0 0.0
        %886 = vmatprep.subr.mxu0 0.0
        %887 = vmatpush1.msra.mxu0 0.0
        %888 = vmatprep.subr.mxu0 0.0
        %889 = vmatpush1.msra.mxu0 0.0
        %890 = vmatprep.subr.mxu0 0.0
        %891 = vmatpush1.msra.mxu0 0.0
        %892 = vmatprep.subr.mxu0 0.0
        %893 = vmatpush1.msra.mxu0 0.0
        %894 = vmatprep.subr.mxu0 0.0
        %895 = vmatpush1.msra.mxu0 0.0
        %896 = vmatprep.subr.mxu0 0.0
        %897 = vmatpush1.msra.mxu0 0.0
        %898 = vmatprep.subr.mxu0 0.0
        %899 = vmatpush1.msra.mxu0 0.0
        %900 = vmatprep.subr.mxu0 0.0
        %901 = vmatpush1.msra.mxu0 0.0
        %902 = vmatprep.subr.mxu0 0.0
        %903 = vmatpush1.msra.mxu0 0.0
        %904 = vmatprep.subr.mxu0 0.0
        %905 = vmatpush1.msra.mxu0 0.0
        %906 = vmatprep.subr.mxu0 0.0
        %907 = vmatpush1.msra.mxu0 0.0
        %908 = vmatprep.subr.mxu0 0.0
        %909 = vmatpush1.msra.mxu0 0.0
        %910 = vmatprep.mubr.f32.mxu0 0.0
        %911 = vmatmul.mubr.f32.gmra.mrb[0].mxu0 %v844
        %v912 = vpop.f32.mrb[0].mxu0
        %v913 = vadd.f32 0.0, %v912
        %v914 = vpop.f32.mrb[0].mxu0
        %915 = vdwg.mxu0
        %v916 = vmul.f32 %v913, 0.125
        %v917 = vsel %vm592, %v838, 0.0
        %918 = vadd.xlane.f32.xlu0 %v917
        %v919 = vpop.xlane.xlu0 %918
        %v921 = vsel %vm314, %v760, 0.0
        %922 = vadd.xlane.f32.xlu0 %v921
        %v923 = vpop.xlane.xlu0 %922
        %v924 = vmul.f32 %v923, 1e-07
        %v925 = vadd.f32 %v919, %v924
        %v926 = vrcp.pop %v925
        %v927 = vmul.f32 %v916, %v926
        %v928 = vld [vmem:[%s2 + $0x2] sm:$0x1]
        %v929 = vld [vmem:[%s3 + $0x2] sm:$0x1]
        %v930 = vld [vmem:[%s4 + $0x2] sm:$0x1]
        %v931 = vld [vmem:[%s5 + $0x2] sm:$0x1]
        %932 = vrot.lane.b32.xlu0 %v387, 64
        %v933 = vpop.permute.xlu0 %932
        %v935 = vsel %vm314, %v933, 0.0
        %936 = vadd.xlane.f32.xlu0 %v935
        %v937 = vpop.xlane.xlu0 %936
        %v938 = vmul.f32 %v937, %v471
        %v939 = vsub.f32 %v387, %v938
        %v940 = vmul.f32 %v939, %v939
        %942 = vrot.lane.b32.xlu0 %v940, 64
        %v943 = vpop.permute.xlu0 %942
        %v945 = vsel %vm314, %v943, 0.0
        %946 = vadd.xlane.f32.xlu0 %v945
        %v947 = vpop.xlane.xlu0 %946
        %v948 = vmul.f32 %v947, %v471
        %v949 = vadd.f32 %v948, 1e-07
        %v950 = vrsqrt.pop %v949
        %v951 = vmul.f32 %v939, %v950
        %v952 = vlaneseq
        %v953 = vshrl.u32 %v952, 7
        %v954 = vsub.s32 0, %v953
        %v955 = vrot.slane %v928, %v954
        %957 = vrot.lane.b32.xlu0 %v955, 64
        %v958 = vpop.permute.xlu0 %957
        %v960 = vmul.f32 %v951, %v958
        %v961 = vlaneseq
        %v962 = vshrl.u32 %v961, 7
        %v963 = vsub.s32 0, %v962
        %v964 = vrot.slane %v929, %v963
        %966 = vrot.lane.b32.xlu0 %v964, 64
        %v967 = vpop.permute.xlu0 %966
        %v969 = vadd.f32 %v960, %v967
        %970 = vrot.lane.b32.xlu0 %v456, 64
        %v971 = vpop.permute.xlu0 %970
        %v973 = vsel %vm314, %v971, 0.0
        %974 = vadd.xlane.f32.xlu0 %v973
        %v975 = vpop.xlane.xlu0 %974
        %v976 = vmul.f32 %v975, %v471
        %v977 = vsub.f32 %v456, %v976
        %v978 = vmul.f32 %v977, %v977
        %980 = vrot.lane.b32.xlu0 %v978, 64
        %v981 = vpop.permute.xlu0 %980
        %v983 = vsel %vm314, %v981, 0.0
        %984 = vadd.xlane.f32.xlu0 %v983
        %v985 = vpop.xlane.xlu0 %984
        %v986 = vmul.f32 %v985, %v471
        %v987 = vadd.f32 %v986, 1e-07
        %v988 = vrsqrt.pop %v987
        %v989 = vmul.f32 %v977, %v988
        %v990 = vlaneseq
        %v991 = vshrl.u32 %v990, 7
        %v992 = vsub.s32 0, %v991
        %v993 = vrot.slane %v930, %v992
        %995 = vrot.lane.b32.xlu0 %v993, 64
        %v996 = vpop.permute.xlu0 %995
        %v998 = vmul.f32 %v989, %v996
        %v999 = vlaneseq
        %v1000 = vshrl.u32 %v999, 7
        %v1001 = vsub.s32 0, %v1000
        %v1002 = vrot.slane %v931, %v1001
        %1004 = vrot.lane.b32.xlu0 %v1002, 64
        %v1005 = vpop.permute.xlu0 %1004
        %v1007 = vadd.f32 %v998, %v1005
        %1008 = vrot.lane.b32.xlu0 %v385, 64
        %v1009 = vpop.permute.xlu0 %1008
        %1011 = vrot.lane.b32.xlu0 %v969, 64
        %v1012 = vpop.permute.xlu0 %1011
        %v1013 = vsel %vm314, %v1009, 0
        %v1015 = vsel %vm314, %v1012, 0
        %1017 = vmatprep.subr.mxu0 0.0
        %1018 = vmatpush1.xpose.msra.mxu0 %v1015
        %1019 = vmatprep.subr.mxu0 0.0
        %1020 = vmatpush1.xpose.msra.mxu0 0.0
        %1021 = vmatprep.subr.mxu0 0.0
        %1022 = vmatpush1.xpose.msra.mxu0 0.0
        %1023 = vmatprep.subr.mxu0 0.0
        %1024 = vmatpush1.xpose.msra.mxu0 0.0
        %1025 = vmatprep.subr.mxu0 0.0
        %1026 = vmatpush1.xpose.msra.mxu0 0.0
        %1027 = vmatprep.subr.mxu0 0.0
        %1028 = vmatpush1.xpose.msra.mxu0 0.0
        %1029 = vmatprep.subr.mxu0 0.0
        %1030 = vmatpush1.xpose.msra.mxu0 0.0
        %1031 = vmatprep.subr.mxu0 0.0
        %1032 = vmatpush1.xpose.msra.mxu0 0.0
        %1033 = vmatprep.subr.mxu0 0.0
        %1034 = vmatpush1.xpose.msra.mxu0 0.0
        %1035 = vmatprep.subr.mxu0 0.0
        %1036 = vmatpush1.xpose.msra.mxu0 0.0
        %1037 = vmatprep.subr.mxu0 0.0
        %1038 = vmatpush1.xpose.msra.mxu0 0.0
        %1039 = vmatprep.subr.mxu0 0.0
        %1040 = vmatpush1.xpose.msra.mxu0 0.0
        %1041 = vmatprep.subr.mxu0 0.0
        %1042 = vmatpush1.xpose.msra.mxu0 0.0
        %1043 = vmatprep.subr.mxu0 0.0
        %1044 = vmatpush1.xpose.msra.mxu0 0.0
        %1045 = vmatprep.subr.mxu0 0.0
        %1046 = vmatpush1.xpose.msra.mxu0 0.0
        %1047 = vmatprep.subr.mxu0 0.0
        %1048 = vmatpush1.xpose.msra.mxu0 0.0
        %1049 = vmatprep.subr.mxu0 0.0
        %1050 = vmatpush1.xpose.msra.mxu0 0.0
        %1051 = vmatprep.subr.mxu0 0.0
        %1052 = vmatpush1.xpose.msra.mxu0 0.0
        %1053 = vmatprep.subr.mxu0 0.0
        %1054 = vmatpush1.xpose.msra.mxu0 0.0
        %1055 = vmatprep.subr.mxu0 0.0
        %1056 = vmatpush1.xpose.msra.mxu0 0.0
        %1057 = vmatprep.subr.mxu0 0.0
        %1058 = vmatpush1.xpose.msra.mxu0 0.0
        %1059 = vmatprep.subr.mxu0 0.0
        %1060 = vmatpush1.xpose.msra.mxu0 0.0
        %1061 = vmatprep.subr.mxu0 0.0
        %1062 = vmatpush1.xpose.msra.mxu0 0.0
        %1063 = vmatprep.subr.mxu0 0.0
        %1064 = vmatpush1.xpose.msra.mxu0 0.0
        %1065 = vmatprep.subr.mxu0 0.0
        %1066 = vmatpush1.xpose.msra.mxu0 0.0
        %1067 = vmatprep.subr.mxu0 0.0
        %1068 = vmatpush1.xpose.msra.mxu0 0.0
        %1069 = vmatprep.subr.mxu0 0.0
        %1070 = vmatpush1.xpose.msra.mxu0 0.0
        %1071 = vmatprep.subr.mxu0 0.0
        %1072 = vmatpush1.xpose.msra.mxu0 0.0
        %1073 = vmatprep.subr.mxu0 0.0
        %1074 = vmatpush1.xpose.msra.mxu0 0.0
        %1075 = vmatprep.subr.mxu0 0.0
        %1076 = vmatpush1.xpose.msra.mxu0 0.0
        %1077 = vmatprep.subr.mxu0 0.0
        %1078 = vmatpush1.xpose.msra.mxu0 0.0
        %1079 = vmatprep.subr.mxu0 0.0
        %1080 = vmatpush1.xpose.msra.mxu0 0.0
        %1081 = vmatprep.mubr.f32.mxu0 0.0
        %1082 = vmatmul.mubr.f32.gmra.mrb[0].mxu0 %v1013
        %v1083 = vpop.f32.mrb[0].mxu0
        %v1084 = vadd.f32 0.0, %v1083
        %v1085 = vpop.f32.mrb[0].mxu0
        %1086 = vdwg.mxu0
        %v1087 = vsel %vm463, %v1084, 0.0
        %1089 = vrot.lane.b32.xlu0 %v1007, 64
        %v1090 = vpop.permute.xlu0 %1089
        %v1093 = vsel %vm592, %v1087, 0
        %1095 = vmatprep.subr.mxu0 0.0
        %1096 = vmatpush1.msra.mxu0 %v1090
        %1097 = vmatprep.subr.mxu0 0.0
        %1098 = vmatpush1.msra.mxu0 0.0
        %1099 = vmatprep.subr.mxu0 0.0
        %1100 = vmatpush1.msra.mxu0 0.0
        %1101 = vmatprep.subr.mxu0 0.0
        %1102 = vmatpush1.msra.mxu0 0.0
        %1103 = vmatprep.subr.mxu0 0.0
        %1104 = vmatpush1.msra.mxu0 0.0
        %1105 = vmatprep.subr.mxu0 0.0
        %1106 = vmatpush1.msra.mxu0 0.0
        %1107 = vmatprep.subr.mxu0 0.0
        %1108 = vmatpush1.msra.mxu0 0.0
        %1109 = vmatprep.subr.mxu0 0.0
        %1110 = vmatpush1.msra.mxu0 0.0
        %1111 = vmatprep.subr.mxu0 0.0
        %1112 = vmatpush1.msra.mxu0 0.0
        %1113 = vmatprep.subr.mxu0 0.0
        %1114 = vmatpush1.msra.mxu0 0.0
        %1115 = vmatprep.subr.mxu0 0.0
        %1116 = vmatpush1.msra.mxu0 0.0
        %1117 = vmatprep.subr.mxu0 0.0
        %1118 = vmatpush1.msra.mxu0 0.0
        %1119 = vmatprep.subr.mxu0 0.0
        %1120 = vmatpush1.msra.mxu0 0.0
        %1121 = vmatprep.subr.mxu0 0.0
        %1122 = vmatpush1.msra.mxu0 0.0
        %1123 = vmatprep.subr.mxu0 0.0
        %1124 = vmatpush1.msra.mxu0 0.0
        %1125 = vmatprep.subr.mxu0 0.0
        %1126 = vmatpush1.msra.mxu0 0.0
        %1127 = vmatprep.subr.mxu0 0.0
        %1128 = vmatpush1.msra.mxu0 0.0
        %1129 = vmatprep.subr.mxu0 0.0
        %1130 = vmatpush1.msra.mxu0 0.0
        %1131 = vmatprep.subr.mxu0 0.0
        %1132 = vmatpush1.msra.mxu0 0.0
        %1133 = vmatprep.subr.mxu0 0.0
        %1134 = vmatpush1.msra.mxu0 0.0
        %1135 = vmatprep.subr.mxu0 0.0
        %1136 = vmatpush1.msra.mxu0 0.0
        %1137 = vmatprep.subr.mxu0 0.0
        %1138 = vmatpush1.msra.mxu0 0.0
        %1139 = vmatprep.subr.mxu0 0.0
        %1140 = vmatpush1.msra.mxu0 0.0
        %1141 = vmatprep.subr.mxu0 0.0
        %1142 = vmatpush1.msra.mxu0 0.0
        %1143 = vmatprep.subr.mxu0 0.0
        %1144 = vmatpush1.msra.mxu0 0.0
        %1145 = vmatprep.subr.mxu0 0.0
        %1146 = vmatpush1.msra.mxu0 0.0
        %1147 = vmatprep.subr.mxu0 0.0
        %1148 = vmatpush1.msra.mxu0 0.0
        %1149 = vmatprep.subr.mxu0 0.0
        %1150 = vmatpush1.msra.mxu0 0.0
        %1151 = vmatprep.subr.mxu0 0.0
        %1152 = vmatpush1.msra.mxu0 0.0
        %1153 = vmatprep.subr.mxu0 0.0
        %1154 = vmatpush1.msra.mxu0 0.0
        %1155 = vmatprep.subr.mxu0 0.0
        %1156 = vmatpush1.msra.mxu0 0.0
        %1157 = vmatprep.subr.mxu0 0.0
        %1158 = vmatpush1.msra.mxu0 0.0
        %1159 = vmatprep.mubr.f32.mxu0 0.0
        %1160 = vmatmul.mubr.f32.gmra.mrb[0].mxu0 %v1093
        %v1161 = vpop.f32.mrb[0].mxu0
        %v1162 = vadd.f32 0.0, %v1161
        %v1163 = vpop.f32.mrb[0].mxu0
        %1164 = vdwg.mxu0
        %v1165 = vmul.f32 %v1162, 0.125
        %v1166 = vsel %vm592, %v1087, 0.0
        %1167 = vadd.xlane.f32.xlu0 %v1166
        %v1168 = vpop.xlane.xlu0 %1167
        %v1170 = vsel %vm314, %v1009, 0.0
        %1171 = vadd.xlane.f32.xlu0 %v1170
        %v1172 = vpop.xlane.xlu0 %1171
        %v1173 = vmul.f32 %v1172, 1e-07
        %v1174 = vadd.f32 %v1168, %v1173
        %v1175 = vrcp.pop %v1174
        %v1176 = vmul.f32 %v1165, %v1175
        %v1177 = vld [vmem:[%s2 + $0x3] sm:$0x1]
        %v1178 = vld [vmem:[%s3 + $0x3] sm:$0x1]
        %v1179 = vld [vmem:[%s4 + $0x3] sm:$0x1]
        %v1180 = vld [vmem:[%s5 + $0x3] sm:$0x1]
        %1181 = vrot.lane.b32.xlu0 %v387, 32
        %v1182 = vpop.permute.xlu0 %1181
        %v1184 = vsel %vm314, %v1182, 0.0
        %1185 = vadd.xlane.f32.xlu0 %v1184
        %v1186 = vpop.xlane.xlu0 %1185
        %v1187 = vmul.f32 %v1186, %v471
        %v1188 = vsub.f32 %v387, %v1187
        %v1189 = vmul.f32 %v1188, %v1188
        %1191 = vrot.lane.b32.xlu0 %v1189, 32
        %v1192 = vpop.permute.xlu0 %1191
        %v1194 = vsel %vm314, %v1192, 0.0
        %1195 = vadd.xlane.f32.xlu0 %v1194
        %v1196 = vpop.xlane.xlu0 %1195
        %v1197 = vmul.f32 %v1196, %v471
        %v1198 = vadd.f32 %v1197, 1e-07
        %v1199 = vrsqrt.pop %v1198
        %v1200 = vmul.f32 %v1188, %v1199
        %v1201 = vlaneseq
        %v1202 = vshrl.u32 %v1201, 7
        %v1203 = vsub.s32 0, %v1202
        %v1204 = vrot.slane %v1177, %v1203
        %1206 = vrot.lane.b32.xlu0 %v1204, 96
        %v1207 = vpop.permute.xlu0 %1206
        %v1209 = vmul.f32 %v1200, %v1207
        %v1210 = vlaneseq
        %v1211 = vshrl.u32 %v1210, 7
        %v1212 = vsub.s32 0, %v1211
        %v1213 = vrot.slane %v1178, %v1212
        %1215 = vrot.lane.b32.xlu0 %v1213, 96
        %v1216 = vpop.permute.xlu0 %1215
        %v1218 = vadd.f32 %v1209, %v1216
        %1219 = vrot.lane.b32.xlu0 %v456, 32
        %v1220 = vpop.permute.xlu0 %1219
        %v1222 = vsel %vm314, %v1220, 0.0
        %1223 = vadd.xlane.f32.xlu0 %v1222
        %v1224 = vpop.xlane.xlu0 %1223
        %v1225 = vmul.f32 %v1224, %v471
        %v1226 = vsub.f32 %v456, %v1225
        %v1227 = vmul.f32 %v1226, %v1226
        %1229 = vrot.lane.b32.xlu0 %v1227, 32
        %v1230 = vpop.permute.xlu0 %1229
        %v1232 = vsel %vm314, %v1230, 0.0
        %1233 = vadd.xlane.f32.xlu0 %v1232
        %v1234 = vpop.xlane.xlu0 %1233
        %v1235 = vmul.f32 %v1234, %v471
        %v1236 = vadd.f32 %v1235, 1e-07
        %v1237 = vrsqrt.pop %v1236
        %v1238 = vmul.f32 %v1226, %v1237
        %v1239 = vlaneseq
        %v1240 = vshrl.u32 %v1239, 7
        %v1241 = vsub.s32 0, %v1240
        %v1242 = vrot.slane %v1179, %v1241
        %1244 = vrot.lane.b32.xlu0 %v1242, 96
        %v1245 = vpop.permute.xlu0 %1244
        %v1247 = vmul.f32 %v1238, %v1245
        %v1248 = vlaneseq
        %v1249 = vshrl.u32 %v1248, 7
        %v1250 = vsub.s32 0, %v1249
        %v1251 = vrot.slane %v1180, %v1250
        %1253 = vrot.lane.b32.xlu0 %v1251, 96
        %v1254 = vpop.permute.xlu0 %1253
        %v1256 = vadd.f32 %v1247, %v1254
        %1257 = vrot.lane.b32.xlu0 %v385, 32
        %v1258 = vpop.permute.xlu0 %1257
        %1260 = vrot.lane.b32.xlu0 %v1218, 32
        %v1261 = vpop.permute.xlu0 %1260
        %v1262 = vsel %vm314, %v1258, 0
        %v1264 = vsel %vm314, %v1261, 0
        %1266 = vmatprep.subr.mxu0 0.0
        %1267 = vmatpush1.xpose.msra.mxu0 %v1264
        %1268 = vmatprep.subr.mxu0 0.0
        %1269 = vmatpush1.xpose.msra.mxu0 0.0
        %1270 = vmatprep.subr.mxu0 0.0
        %1271 = vmatpush1.xpose.msra.mxu0 0.0
        %1272 = vmatprep.subr.mxu0 0.0
        %1273 = vmatpush1.xpose.msra.mxu0 0.0
        %1274 = vmatprep.subr.mxu0 0.0
        %1275 = vmatpush1.xpose.msra.mxu0 0.0
        %1276 = vmatprep.subr.mxu0 0.0
        %1277 = vmatpush1.xpose.msra.mxu0 0.0
        %1278 = vmatprep.subr.mxu0 0.0
        %1279 = vmatpush1.xpose.msra.mxu0 0.0
        %1280 = vmatprep.subr.mxu0 0.0
        %1281 = vmatpush1.xpose.msra.mxu0 0.0
        %1282 = vmatprep.subr.mxu0 0.0
        %1283 = vmatpush1.xpose.msra.mxu0 0.0
        %1284 = vmatprep.subr.mxu0 0.0
        %1285 = vmatpush1.xpose.msra.mxu0 0.0
        %1286 = vmatprep.subr.mxu0 0.0
        %1287 = vmatpush1.xpose.msra.mxu0 0.0
        %1288 = vmatprep.subr.mxu0 0.0
        %1289 = vmatpush1.xpose.msra.mxu0 0.0
        %1290 = vmatprep.subr.mxu0 0.0
        %1291 = vmatpush1.xpose.msra.mxu0 0.0
        %1292 = vmatprep.subr.mxu0 0.0
        %1293 = vmatpush1.xpose.msra.mxu0 0.0
        %1294 = vmatprep.subr.mxu0 0.0
        %1295 = vmatpush1.xpose.msra.mxu0 0.0
        %1296 = vmatprep.subr.mxu0 0.0
        %1297 = vmatpush1.xpose.msra.mxu0 0.0
        %1298 = vmatprep.subr.mxu0 0.0
        %1299 = vmatpush1.xpose.msra.mxu0 0.0
        %1300 = vmatprep.subr.mxu0 0.0
        %1301 = vmatpush1.xpose.msra.mxu0 0.0
        %1302 = vmatprep.subr.mxu0 0.0
        %1303 = vmatpush1.xpose.msra.mxu0 0.0
        %1304 = vmatprep.subr.mxu0 0.0
        %1305 = vmatpush1.xpose.msra.mxu0 0.0
        %1306 = vmatprep.subr.mxu0 0.0
        %1307 = vmatpush1.xpose.msra.mxu0 0.0
        %1308 = vmatprep.subr.mxu0 0.0
        %1309 = vmatpush1.xpose.msra.mxu0 0.0
        %1310 = vmatprep.subr.mxu0 0.0
        %1311 = vmatpush1.xpose.msra.mxu0 0.0
        %1312 = vmatprep.subr.mxu0 0.0
        %1313 = vmatpush1.xpose.msra.mxu0 0.0
        %1314 = vmatprep.subr.mxu0 0.0
        %1315 = vmatpush1.xpose.msra.mxu0 0.0
        %1316 = vmatprep.subr.mxu0 0.0
        %1317 = vmatpush1.xpose.msra.mxu0 0.0
        %1318 = vmatprep.subr.mxu0 0.0
        %1319 = vmatpush1.xpose.msra.mxu0 0.0
        %1320 = vmatprep.subr.mxu0 0.0
        %1321 = vmatpush1.xpose.msra.mxu0 0.0
        %1322 = vmatprep.subr.mxu0 0.0
        %1323 = vmatpush1.xpose.msra.mxu0 0.0
        %1324 = vmatprep.subr.mxu0 0.0
        %1325 = vmatpush1.xpose.msra.mxu0 0.0
        %1326 = vmatprep.subr.mxu0 0.0
        %1327 = vmatpush1.xpose.msra.mxu0 0.0
        %1328 = vmatprep.subr.mxu0 0.0
        %1329 = vmatpush1.xpose.msra.mxu0 0.0
        %1330 = vmatprep.mubr.f32.mxu0 0.0
        %1331 = vmatmul.mubr.f32.gmra.mrb[0].mxu0 %v1262
        %v1332 = vpop.f32.mrb[0].mxu0
        %v1333 = vadd.f32 0.0, %v1332
        %v1334 = vpop.f32.mrb[0].mxu0
        %1335 = vdwg.mxu0
        %v1336 = vsel %vm463, %v1333, 0.0
        %1338 = vrot.lane.b32.xlu0 %v1256, 32
        %v1339 = vpop.permute.xlu0 %1338
        %v1342 = vsel %vm592, %v1336, 0
        %1344 = vmatprep.subr.mxu0 0.0
        %1345 = vmatpush1.msra.mxu0 %v1339
        %1346 = vmatprep.subr.mxu0 0.0
        %1347 = vmatpush1.msra.mxu0 0.0
        %1348 = vmatprep.subr.mxu0 0.0
        %1349 = vmatpush1.msra.mxu0 0.0
        %1350 = vmatprep.subr.mxu0 0.0
        %1351 = vmatpush1.msra.mxu0 0.0
        %1352 = vmatprep.subr.mxu0 0.0
        %1353 = vmatpush1.msra.mxu0 0.0
        %1354 = vmatprep.subr.mxu0 0.0
        %1355 = vmatpush1.msra.mxu0 0.0
        %1356 = vmatprep.subr.mxu0 0.0
        %1357 = vmatpush1.msra.mxu0 0.0
        %1358 = vmatprep.subr.mxu0 0.0
        %1359 = vmatpush1.msra.mxu0 0.0
        %1360 = vmatprep.subr.mxu0 0.0
        %1361 = vmatpush1.msra.mxu0 0.0
        %1362 = vmatprep.subr.mxu0 0.0
        %1363 = vmatpush1.msra.mxu0 0.0
        %1364 = vmatprep.subr.mxu0 0.0
        %1365 = vmatpush1.msra.mxu0 0.0
        %1366 = vmatprep.subr.mxu0 0.0
        %1367 = vmatpush1.msra.mxu0 0.0
        %1368 = vmatprep.subr.mxu0 0.0
        %1369 = vmatpush1.msra.mxu0 0.0
        %1370 = vmatprep.subr.mxu0 0.0
        %1371 = vmatpush1.msra.mxu0 0.0
        %1372 = vmatprep.subr.mxu0 0.0
        %1373 = vmatpush1.msra.mxu0 0.0
        %1374 = vmatprep.subr.mxu0 0.0
        %1375 = vmatpush1.msra.mxu0 0.0
        %1376 = vmatprep.subr.mxu0 0.0
        %1377 = vmatpush1.msra.mxu0 0.0
        %1378 = vmatprep.subr.mxu0 0.0
        %1379 = vmatpush1.msra.mxu0 0.0
        %1380 = vmatprep.subr.mxu0 0.0
        %1381 = vmatpush1.msra.mxu0 0.0
        %1382 = vmatprep.subr.mxu0 0.0
        %1383 = vmatpush1.msra.mxu0 0.0
        %1384 = vmatprep.subr.mxu0 0.0
        %1385 = vmatpush1.msra.mxu0 0.0
        %1386 = vmatprep.subr.mxu0 0.0
        %1387 = vmatpush1.msra.mxu0 0.0
        %1388 = vmatprep.subr.mxu0 0.0
        %1389 = vmatpush1.msra.mxu0 0.0
        %1390 = vmatprep.subr.mxu0 0.0
        %1391 = vmatpush1.msra.mxu0 0.0
        %1392 = vmatprep.subr.mxu0 0.0
        %1393 = vmatpush1.msra.mxu0 0.0
        %1394 = vmatprep.subr.mxu0 0.0
        %1395 = vmatpush1.msra.mxu0 0.0
        %1396 = vmatprep.subr.mxu0 0.0
        %1397 = vmatpush1.msra.mxu0 0.0
        %1398 = vmatprep.subr.mxu0 0.0
        %1399 = vmatpush1.msra.mxu0 0.0
        %1400 = vmatprep.subr.mxu0 0.0
        %1401 = vmatpush1.msra.mxu0 0.0
        %1402 = vmatprep.subr.mxu0 0.0
        %1403 = vmatpush1.msra.mxu0 0.0
        %1404 = vmatprep.subr.mxu0 0.0
        %1405 = vmatpush1.msra.mxu0 0.0
        %1406 = vmatprep.subr.mxu0 0.0
        %1407 = vmatpush1.msra.mxu0 0.0
        %1408 = vmatprep.mubr.f32.mxu0 0.0
        %1409 = vmatmul.mubr.f32.gmra.mrb[0].mxu0 %v1342
        %v1410 = vpop.f32.mrb[0].mxu0
        %v1411 = vadd.f32 0.0, %v1410
        %v1412 = vpop.f32.mrb[0].mxu0
        %1413 = vdwg.mxu0
        %v1414 = vmul.f32 %v1411, 0.125
        %v1415 = vsel %vm592, %v1336, 0.0
        %1416 = vadd.xlane.f32.xlu0 %v1415
        %v1417 = vpop.xlane.xlu0 %1416
        %v1419 = vsel %vm314, %v1258, 0.0
        %1420 = vadd.xlane.f32.xlu0 %v1419
        %v1421 = vpop.xlane.xlu0 %1420
        %v1422 = vmul.f32 %v1421, 1e-07
        %v1423 = vadd.f32 %v1417, %v1422
        %v1424 = vrcp.pop %v1423
        %v1425 = vmul.f32 %v1414, %v1424
        %1427 = vrot.lane.b32.xlu0 %v927, 32
        %v1428 = vpop.permute.xlu0 %1427
        %1431 = vrot.lane.b32.xlu0 %v1176, 64
        %v1432 = vpop.permute.xlu0 %1431
        %1435 = vrot.lane.b32.xlu0 %v1425, 96
        %v1436 = vpop.permute.xlu0 %1435
        %v1438 = vsel %vm314, %v676, %v1428
        %vm1439 = vcmask 523264
        %v1440 = vsel %vm1439, %v1438, %v1432
        %vm1441 = vcmask 785408
        %v1442 = vsel %vm1441, %v1440, %v1436
        %v1443 = vld [vmem:[%s6] sm:$0xff]
        %v1444 = vld [vmem:[%s6 + $0x8] sm:$0xff]
        %v1445 = vld [vmem:[%s6 + $0x10] sm:$0xff]
        %v1446 = vld [vmem:[%s6 + $0x18] sm:$0xff]
        %v1447 = vld [vmem:[%s6 + $0x20] sm:$0xff]
        %v1448 = vld [vmem:[%s6 + $0x28] sm:$0xff]
        %v1449 = vld [vmem:[%s6 + $0x30] sm:$0xff]
        %v1450 = vld [vmem:[%s6 + $0x38] sm:$0xff]
        %v1451 = vld [vmem:[%s6 + $0x40] sm:$0xff]
        %v1452 = vld [vmem:[%s6 + $0x48] sm:$0xff]
        %v1453 = vld [vmem:[%s6 + $0x50] sm:$0xff]
        %v1454 = vld [vmem:[%s6 + $0x58] sm:$0xff]
        %v1455 = vld [vmem:[%s6 + $0x60] sm:$0xff]
        %v1456 = vld [vmem:[%s6 + $0x68] sm:$0xff]
        %v1457 = vld [vmem:[%s6 + $0x70] sm:$0xff]
        %v1458 = vld [vmem:[%s6 + $0x78] sm:$0xff]
        %v1459 = vld [vmem:[%s7] sm:$0x1]
        %v1461 = vlaneseq
        %v1462 = vshrl.u32 %v1461, 7
        %v1463 = vsub.s32 0, %v1462
        %v1464 = vrot.slane %v1459, %v1463
        %1466 = vmatprep.subr.mxu0 0.0
        %1467 = vmatpush1.msra.mxu0 %v1443
        %1468 = vmatprep.subr.mxu0 0.0
        %1469 = vmatpush1.msra.mxu0 %v1444
        %1470 = vmatprep.subr.mxu0 0.0
        %1471 = vmatpush1.msra.mxu0 %v1445
        %1472 = vmatprep.subr.mxu0 0.0
        %1473 = vmatpush1.msra.mxu0 %v1446
        %1474 = vmatprep.subr.mxu0 0.0
        %1475 = vmatpush1.msra.mxu0 %v1447
        %1476 = vmatprep.subr.mxu0 0.0
        %1477 = vmatpush1.msra.mxu0 %v1448
        %1478 = vmatprep.subr.mxu0 0.0
        %1479 = vmatpush1.msra.mxu0 %v1449
        %1480 = vmatprep.subr.mxu0 0.0
        %1481 = vmatpush1.msra.mxu0 %v1450
        %1482 = vmatprep.subr.mxu0 0.0
        %1483 = vmatpush1.msra.mxu0 %v1451
        %1484 = vmatprep.subr.mxu0 0.0
        %1485 = vmatpush1.msra.mxu0 %v1452
        %1486 = vmatprep.subr.mxu0 0.0
        %1487 = vmatpush1.msra.mxu0 %v1453
        %1488 = vmatprep.subr.mxu0 0.0
        %1489 = vmatpush1.msra.mxu0 %v1454
        %1490 = vmatprep.subr.mxu0 0.0
        %1491 = vmatpush1.msra.mxu0 %v1455
        %1492 = vmatprep.subr.mxu0 0.0
        %1493 = vmatpush1.msra.mxu0 %v1456
        %1494 = vmatprep.subr.mxu0 0.0
        %1495 = vmatpush1.msra.mxu0 %v1457
        %1496 = vmatprep.subr.mxu0 0.0
        %1497 = vmatpush1.msra.mxu0 %v1458
        %1498 = vmatprep.subr.mxu0 0.0
        %1499 = vmatpush1.msra.mxu0 0.0
        %1500 = vmatprep.subr.mxu0 0.0
        %1501 = vmatpush1.msra.mxu0 0.0
        %1502 = vmatprep.subr.mxu0 0.0
        %1503 = vmatpush1.msra.mxu0 0.0
        %1504 = vmatprep.subr.mxu0 0.0
        %1505 = vmatpush1.msra.mxu0 0.0
        %1506 = vmatprep.subr.mxu0 0.0
        %1507 = vmatpush1.msra.mxu0 0.0
        %1508 = vmatprep.subr.mxu0 0.0
        %1509 = vmatpush1.msra.mxu0 0.0
        %1510 = vmatprep.subr.mxu0 0.0
        %1511 = vmatpush1.msra.mxu0 0.0
        %1512 = vmatprep.subr.mxu0 0.0
        %1513 = vmatpush1.msra.mxu0 0.0
        %1514 = vmatprep.subr.mxu0 0.0
        %1515 = vmatpush1.msra.mxu0 0.0
        %1516 = vmatprep.subr.mxu0 0.0
        %1517 = vmatpush1.msra.mxu0 0.0
        %1518 = vmatprep.subr.mxu0 0.0
        %1519 = vmatpush1.msra.mxu0 0.0
        %1520 = vmatprep.subr.mxu0 0.0
        %1521 = vmatpush1.msra.mxu0 0.0
        %1522 = vmatprep.subr.mxu0 0.0
        %1523 = vmatpush1.msra.mxu0 0.0
        %1524 = vmatprep.subr.mxu0 0.0
        %1525 = vmatpush1.msra.mxu0 0.0
        %1526 = vmatprep.subr.mxu0 0.0
        %1527 = vmatpush1.msra.mxu0 0.0
        %1528 = vmatprep.subr.mxu0 0.0
        %1529 = vmatpush1.msra.mxu0 0.0
        %1530 = vmatprep.mubr.f32.mxu0 0.0
        %1531 = vmatmul.mubr.f32.gmra.mrb[0].mxu0 %v1442
        %v1532 = vpop.f32.mrb[0].mxu0
        %v1533 = vadd.f32 %v1464, %v1532
        %v1534 = vpop.f32.mrb[0].mxu0
        %1535 = vdwg.mxu0
        %1536 = vst.msk [vmem:[%s296] sm:$0xff] %vm314, %v1533
        %s1537 = sand.u32 %s203, 1
        %s1538 = scalar_lea.sflag [#allocation3], %s1537
        %s1539 = sand.u32 %s203, 1
        %s1540 = smul.addr %s1539, 8
        %s1541 = scalar_lea.vmem [#allocation2], %s1540
        // Predicated region
        $region53: #{tpu_custom_call.1} parent=51 // pred_check
          %p1542 = pneg %p213
        $region54: #{tpu_custom_call.1} parent=51 // pred_check_branch
          %1544 = sbr.rel (%p1542) target = $region56
        $region55: #{tpu_custom_call.1} parent=51 // pred_region
          %s1546 = ssub.s32 128, 128
          %1547 = vsyncadd %s1538, %s1546
          %s1548 = smul.addr %s22, 128
          %s1549 = scalar_lea.hbm %s8, %s1548
          %s1551 = sshll.u32 %s1541, 4
          %s1552 = int_to_ptr.vmem [resolvable:$true] %s1551
          %1554 = dma.vmem_to_hbm [thread:$0]  %s1552, 128, %s1549, %s1538
        $region56: #{tpu_custom_call.1} parent=51 // pred_fallthru
          _
      $region52: #{tpu_custom_call.1} parent=5 // pred_fallthru
        _
      %p1555 = scmp.le.s32.totalorder 2, %s17
      // Predicated region
      $region57: #{tpu_custom_call.1} parent=5 // pred_check
        %p1556 = pneg %p1555
      $region58: #{tpu_custom_call.1} parent=5 // pred_check_branch
        %1558 = sbr.rel (%p1556) target = $region60
      $region59: #{tpu_custom_call.1} parent=5 // pred_region
        %s1559 = ssub.s32 %s17, 2
        // Predicated region
        $region61: #{tpu_custom_call.1} parent=59 // pred_check
          %p1560 = pneg %p219
        $region62: #{tpu_custom_call.1} parent=59 // pred_check_branch
          %1562 = sbr.rel (%p1560) target = $region64
        $region63: #{tpu_custom_call.1} parent=59 // pred_region
          %s1563 = sand.u32 %s204, 1
          %s1564 = scalar_lea.sflag [#allocation3], %s1563
          %s1565 = sand.u32 %s204, 1
          %s1566 = smul.addr %s1565, 8
          %s1567 = scalar_lea.vmem [#allocation2], %s1566
          %1568 = dma.done %s1564, 128
        $region64: #{tpu_custom_call.1} parent=59 // pred_fallthru
          _
      $region60: #{tpu_custom_call.1} parent=5 // pred_fallthru
        _
    $region6: #{tpu_custom_call.1} parent=1 // loop_footer
      %s21 = sadd.s32 1, %s17
    $region7: #{tpu_custom_call.1} parent=1 // loop_footer_branch
      %16 = sbr.rel target = $region3
    $region8: #{tpu_custom_call.1} parent=1 // loop_exit
      _
    %1569 = vsyncpa [#allocation3], 1
    %s1570 = scalar_lea.sflag [#allocation3], 1
    %1571 = vsyncpa %s1570, 1

</llo_original>
